<compile_context>
chip_gen: v7x
topology: tpu7x:2x2x1
jax: 0.10.0
libtpu: 0.0.40
codegen_flags: <defaults>
</compile_context>

<pallas_src>
import functools

import jax
import jax.numpy as jnp
from jax.experimental import pallas as pl
from jax.experimental.pallas import tpu as pltpu


def _mlp_kernel(x_ref, w1_ref, b1_ref, w2_ref, b2_ref, w3_ref, b3_ref, o_ref):
    # In-kernel downcast of the f32 activation tile (keeps HBM-side x traffic
    # at a single f32 read; the cast is a VPU op hidden under DMA/MXU work).
    x = x_ref[...].astype(jnp.bfloat16)
    # Layer 1: Linear + ReLU  (bf16 operands into MXU, f32 accumulation)
    h = jnp.dot(x, w1_ref[...], preferred_element_type=jnp.float32)
    h = jnp.maximum(h + b1_ref[...], 0.0).astype(jnp.bfloat16)
    # Layer 2: Linear + ReLU
    h = jnp.dot(h, w2_ref[...], preferred_element_type=jnp.float32)
    h = jnp.maximum(h + b2_ref[...], 0.0).astype(jnp.bfloat16)
    # Layer 3: Linear + Tanh (tanh lowers to the EUP -> effectively free)
    h = jnp.dot(h, w3_ref[...], preferred_element_type=jnp.float32)
    o_ref[...] = jnp.tanh(h + b3_ref[...]).astype(o_ref.dtype)


def prepare_generator_params(w1, b1, w2, b2, w3, b3):
    """One-time f32 -> bf16 cast of the weight matrices (MXU operands).

    Call once per weight update (NOT per forward) so the weight-cast HBM
    traffic disappears from the hot path.  Biases stay f32.
    """
    return (w1.astype(jnp.bfloat16), b1,
            w2.astype(jnp.bfloat16), b2,
            w3.astype(jnp.bfloat16), b3)


def _pick_block_b(batch, block_b):
    """Batch-tile heuristic: >= 4 grid steps when the batch allows (>= 2 per
    v7x TensorCore -> real software pipelining), floor 128 (MXU alignment),
    and never larger than the batch (partial block handled by Pallas)."""
    bb = block_b
    while bb > 128 and pl.cdiv(batch, bb) < 4:
        bb //= 2
    return min(bb, batch)


@functools.partial(jax.jit, static_argnames=("block_b", "out_dtype"))
def generator_forward(x, w1b, b1, w2b, b2, w3b, b3, *, block_b=256,
                      out_dtype=jnp.float32):
    """x: (B, input_size) f32, weights bf16 (see prepare_generator_params)
    -> (B, output_size) out_dtype."""
    B, in_dim = x.shape
    hid = w1b.shape[1]
    out_dim = w3b.shape[1]

    bb = _pick_block_b(B, block_b)
    n_blocks = pl.cdiv(B, bb)

    flops = 2 * B * (in_dim * hid + hid * hid + hid * out_dim)
    bytes_accessed = (
        x.size * 4                                     # f32 input (read once)
        + B * out_dim * jnp.dtype(out_dtype).itemsize  # output
        + (w1b.size + w2b.size + w3b.size) * 2         # bf16 weights
        + (b1.size + b2.size + b3.size) * 4            # f32 biases
    )
    cost = pl.CostEstimate(
        flops=flops,
        transcendentals=B * out_dim,                   # tanh
        bytes_accessed=bytes_accessed,
    )

    return pl.pallas_call(
        _mlp_kernel,
        out_shape=jax.ShapeDtypeStruct((B, out_dim), out_dtype),
        grid_spec=pltpu.PrefetchScalarGridSpec(
            num_scalar_prefetch=0,
            grid=(n_blocks,),
            in_specs=[
                # batch-tiled f32 input (partial last block handled by Pallas)
                pl.BlockSpec((bb, in_dim), lambda i: (i, 0)),
                # weights / biases: full arrays, resident for every grid step
                pl.BlockSpec((in_dim, hid), lambda i: (0, 0)),
                pl.BlockSpec((1, hid), lambda i: (0, 0)),
                pl.BlockSpec((hid, hid), lambda i: (0, 0)),
                pl.BlockSpec((1, hid), lambda i: (0, 0)),
                pl.BlockSpec((hid, out_dim), lambda i: (0, 0)),
                pl.BlockSpec((1, out_dim), lambda i: (0, 0)),
            ],
            out_specs=pl.BlockSpec((bb, out_dim), lambda i: (i, 0)),
        ),
        compiler_params=pltpu.CompilerParams(
            dimension_semantics=("parallel",),
        ),
        cost_estimate=cost,
    )(x, w1b, b1, w2b, b2, w3b, b3)


def _init_linear(key, fan_in, fan_out):
    """PyTorch nn.Linear default init: U(-1/sqrt(fan_in), 1/sqrt(fan_in))."""
    kw, kb = jax.random.split(key)
    bound = 1.0 / jnp.sqrt(float(fan_in))
    w = jax.random.uniform(kw, (fan_in, fan_out), jnp.float32, -bound, bound)
    b = jax.random.uniform(kb, (1, fan_out), jnp.float32, -bound, bound)
    return w, b


def _reference(x, w1, b1, w2, b2, w3, b3):
    """Same bf16-operand / f32-accumulate recipe as the kernel."""
    w1b, w2b, w3b = (w.astype(jnp.bfloat16) for w in (w1, w2, w3))
    h = jnp.dot(x.astype(jnp.bfloat16), w1b, preferred_element_type=jnp.float32)
    h = jnp.maximum(h + b1, 0.0)
    h = jnp.dot(h.astype(jnp.bfloat16), w2b, preferred_element_type=jnp.float32)
    h = jnp.maximum(h + b2, 0.0)
    h = jnp.dot(h.astype(jnp.bfloat16), w3b, preferred_element_type=jnp.float32)
    return jnp.tanh(h + b3)


if __name__ == "__main__":
    # Module constants: input_size=784, hidden_dim=256.  output_size is a
    # constructor arg; a GAN generator typically emits an image -> 784.
    input_size = 784
    hidden_dim = 256
    output_size = 784
    batch = 16           # small test batch; odd sizes also work (no pad/slice)

    key = jax.random.PRNGKey(0)
    kx, k1, k2, k3 = jax.random.split(key, 4)

    x = jax.random.normal(kx, (batch, input_size), jnp.float32)
    w1, b1 = _init_linear(k1, input_size, hidden_dim)
    w2, b2 = _init_linear(k2, hidden_dim, hidden_dim)
    w3, b3 = _init_linear(k3, hidden_dim, output_size)

    # One-time weight prep (bf16 copies reused across forward calls).
    params = prepare_generator_params(w1, b1, w2, b2, w3, b3)

    out = generator_forward(x, *params)
    out = jax.block_until_ready(out)

    ref = _reference(x, w1, b1, w2, b2, w3, b3)
    assert out.shape == (batch, output_size)
    assert jnp.allclose(out, ref, atol=5e-3, rtol=5e-3)

    print("KERNEL_OK")
</pallas_src>

<mosaic_0001>
module attributes {stable_mosaic.version = 11 : i64} {
  func.func @_mlp_kernel(%arg0: i32, %arg1: memref<16x784xf32, #tpu.memory_space<vmem>>, %arg2: memref<784x256xbf16, #tpu.memory_space<vmem>>, %arg3: memref<1x256xf32, #tpu.memory_space<vmem>>, %arg4: memref<256x256xbf16, #tpu.memory_space<vmem>>, %arg5: memref<1x256xf32, #tpu.memory_space<vmem>>, %arg6: memref<256x784xbf16, #tpu.memory_space<vmem>>, %arg7: memref<1x784xf32, #tpu.memory_space<vmem>>, %arg8: memref<16x784xf32, #tpu.memory_space<vmem>>) attributes {dimension_semantics = [#tpu.dimension_semantics<parallel>], iteration_bounds = array<i64: 1>, scalar_prefetch = 0 : i64, scratch_operands = 0 : i64, tpu.core_type = #tpu.core_type<tc>, window_params = [{transform_indices = @transform_0, window_bounds = array<i64: 16, 784>}, {pipeline_mode = #tpu.pipeline_mode<synchronous>, transform_indices = @transform_1, window_bounds = array<i64: 784, 256>}, {pipeline_mode = #tpu.pipeline_mode<synchronous>, transform_indices = @transform_2, window_bounds = array<i64: 1, 256>}, {pipeline_mode = #tpu.pipeline_mode<synchronous>, transform_indices = @transform_3, window_bounds = array<i64: 256, 256>}, {pipeline_mode = #tpu.pipeline_mode<synchronous>, transform_indices = @transform_4, window_bounds = array<i64: 1, 256>}, {pipeline_mode = #tpu.pipeline_mode<synchronous>, transform_indices = @transform_5, window_bounds = array<i64: 256, 784>}, {pipeline_mode = #tpu.pipeline_mode<synchronous>, transform_indices = @transform_6, window_bounds = array<i64: 1, 784>}, {transform_indices = @transform_7, window_bounds = array<i64: 16, 784>}]} {
    %c0 = arith.constant 0 : index
    %c0_0 = arith.constant 0 : index
    %0 = vector.load %arg1[%c0, %c0_0] : memref<16x784xf32, #tpu.memory_space<vmem>>, vector<16x784xf32>
    %1 = arith.truncf %0 : vector<16x784xf32> to vector<16x784xbf16>
    %c0_1 = arith.constant 0 : index
    %c0_2 = arith.constant 0 : index
    %2 = vector.load %arg2[%c0_1, %c0_2] : memref<784x256xbf16, #tpu.memory_space<vmem>>, vector<784x256xbf16>
    %cst = arith.constant dense<0.000000e+00> : vector<16x256xf32>
    %3 = tpu.matmul %1, %2, %cst {dimension_numbers = #tpu.dot_dimension_numbers<[1], [0], [0], [1], [0, 0, 1, 1], [], []>} : vector<16x784xbf16>, vector<784x256xbf16>, vector<16x256xf32> -> vector<16x256xf32>
    %c0_3 = arith.constant 0 : index
    %c0_4 = arith.constant 0 : index
    %4 = vector.load %arg3[%c0_3, %c0_4] : memref<1x256xf32, #tpu.memory_space<vmem>>, vector<1x256xf32>
    %5 = vector.broadcast %4 : vector<1x256xf32> to vector<16x256xf32>
    %6 = arith.addf %3, %5 : vector<16x256xf32>
    %cst_5 = arith.constant 0.000000e+00 : f32
    %7 = vector.broadcast %cst_5 : f32 to vector<16x256xf32>
    %8 = arith.maximumf %6, %7 : vector<16x256xf32>
    %9 = arith.truncf %8 : vector<16x256xf32> to vector<16x256xbf16>
    %c0_6 = arith.constant 0 : index
    %c0_7 = arith.constant 0 : index
    %10 = vector.load %arg4[%c0_6, %c0_7] : memref<256x256xbf16, #tpu.memory_space<vmem>>, vector<256x256xbf16>
    %cst_8 = arith.constant dense<0.000000e+00> : vector<16x256xf32>
    %11 = tpu.matmul %9, %10, %cst_8 {dimension_numbers = #tpu.dot_dimension_numbers<[1], [0], [0], [1], [0, 0, 1, 1], [], []>} : vector<16x256xbf16>, vector<256x256xbf16>, vector<16x256xf32> -> vector<16x256xf32>
    %c0_9 = arith.constant 0 : index
    %c0_10 = arith.constant 0 : index
    %12 = vector.load %arg5[%c0_9, %c0_10] : memref<1x256xf32, #tpu.memory_space<vmem>>, vector<1x256xf32>
    %13 = vector.broadcast %12 : vector<1x256xf32> to vector<16x256xf32>
    %14 = arith.addf %11, %13 : vector<16x256xf32>
    %cst_11 = arith.constant 0.000000e+00 : f32
    %15 = vector.broadcast %cst_11 : f32 to vector<16x256xf32>
    %16 = arith.maximumf %14, %15 : vector<16x256xf32>
    %17 = arith.truncf %16 : vector<16x256xf32> to vector<16x256xbf16>
    %c0_12 = arith.constant 0 : index
    %c0_13 = arith.constant 0 : index
    %18 = vector.load %arg6[%c0_12, %c0_13] : memref<256x784xbf16, #tpu.memory_space<vmem>>, vector<256x784xbf16>
    %cst_14 = arith.constant dense<0.000000e+00> : vector<16x784xf32>
    %19 = tpu.matmul %17, %18, %cst_14 {dimension_numbers = #tpu.dot_dimension_numbers<[1], [0], [0], [1], [0, 0, 1, 1], [], []>} : vector<16x256xbf16>, vector<256x784xbf16>, vector<16x784xf32> -> vector<16x784xf32>
    %c0_15 = arith.constant 0 : index
    %c0_16 = arith.constant 0 : index
    %20 = vector.load %arg7[%c0_15, %c0_16] : memref<1x784xf32, #tpu.memory_space<vmem>>, vector<1x784xf32>
    %21 = vector.broadcast %20 : vector<1x784xf32> to vector<16x784xf32>
    %22 = arith.addf %19, %21 : vector<16x784xf32>
    %23 = math.tanh %22 : vector<16x784xf32>
    %c0_17 = arith.constant 0 : index
    %c0_18 = arith.constant 0 : index
    %24 = vector.load %arg8[%c0_17, %c0_18] : memref<16x784xf32, #tpu.memory_space<vmem>>, vector<16x784xf32>
    tpu.vector_store %arg8[%c0_17, %c0_18], %23 {strides = array<i32>} : memref<16x784xf32, #tpu.memory_space<vmem>>, vector<16x784xf32>,
    return
  }
  func.func @transform_0(%arg0: i32) -> (i32, i32) {
    %c0_i32 = arith.constant 0 : i32
    %c0_i32_0 = arith.constant 0 : i32
    return %arg0, %c0_i32 : i32, i32
  }
  func.func @transform_1(%arg0: i32) -> (i32, i32) {
    %c0_i32 = arith.constant 0 : i32
    %c0_i32_0 = arith.constant 0 : i32
    %c0_i32_1 = arith.constant 0 : i32
    return %c0_i32, %c0_i32_0 : i32, i32
  }
  func.func @transform_2(%arg0: i32) -> (i32, i32) {
    %c0_i32 = arith.constant 0 : i32
    %c0_i32_0 = arith.constant 0 : i32
    %c0_i32_1 = arith.constant 0 : i32
    return %c0_i32, %c0_i32_0 : i32, i32
  }
  func.func @transform_3(%arg0: i32) -> (i32, i32) {
    %c0_i32 = arith.constant 0 : i32
    %c0_i32_0 = arith.constant 0 : i32
    %c0_i32_1 = arith.constant 0 : i32
    return %c0_i32, %c0_i32_0 : i32, i32
  }
  func.func @transform_4(%arg0: i32) -> (i32, i32) {
    %c0_i32 = arith.constant 0 : i32
    %c0_i32_0 = arith.constant 0 : i32
    %c0_i32_1 = arith.constant 0 : i32
    return %c0_i32, %c0_i32_0 : i32, i32
  }
  func.func @transform_5(%arg0: i32) -> (i32, i32) {
    %c0_i32 = arith.constant 0 : i32
    %c0_i32_0 = arith.constant 0 : i32
    %c0_i32_1 = arith.constant 0 : i32
    return %c0_i32, %c0_i32_0 : i32, i32
  }
  func.func @transform_6(%arg0: i32) -> (i32, i32) {
    %c0_i32 = arith.constant 0 : i32
    %c0_i32_0 = arith.constant 0 : i32
    %c0_i32_1 = arith.constant 0 : i32
    return %c0_i32, %c0_i32_0 : i32, i32
  }
  func.func @transform_7(%arg0: i32) -> (i32, i32) {
    %c0_i32 = arith.constant 0 : i32
    %c0_i32_0 = arith.constant 0 : i32
    return %arg0, %c0_i32 : i32, i32
  }
}

</mosaic_0001>

<llo_original>
// kernel: generator_forward.1
$region0: #{generator_forward.1}
  #allocation0 [shape = 'u32[]', space=smem, size = 0x4, offset = 0x4, fixed_abs, tag = 'smem constant byte address 0x4 - core index']
  #allocation1 [shape = 'u32[144,128]{1,0:T(1,128)}', space=vmem, size = 0x12000, scoped, tag = 'internal scratch']
  %s0 = inlined_call_operand.vmem [shape: f32[16,784], index: 0, kind: input, shape index: {}]
  %s1 = inlined_call_operand.vmem [shape: bf16[784,256], index: 1, kind: input, shape index: {}]
  %s2 = inlined_call_operand.vmem [shape: f32[1,256], index: 2, kind: input, shape index: {}]
  %s3 = inlined_call_operand.vmem [shape: bf16[256,256], index: 3, kind: input, shape index: {}]
  %s4 = inlined_call_operand.vmem [shape: f32[1,256], index: 4, kind: input, shape index: {}]
  %s5 = inlined_call_operand.vmem [shape: bf16[256,784], index: 5, kind: input, shape index: {}]
  %s6 = inlined_call_operand.vmem [shape: f32[1,784], index: 6, kind: input, shape index: {}]
  %s7 = inlined_call_operand.hbm [shape: f32[16,784], index: 7, kind: output, shape index: {}]
  %s8 = sld [smem:[#allocation0]]
  $region38: #{generator_forward.1} parent=0
    _
  %s10 = ssub.s32 1, %s8
  %s11 = scalar_select 0, %s10, %s8
  $region1: #{generator_forward.1} parent=0
    #allocation2 [shape = 'u8[57344]{0}', space=vmem, size = 0xe000, scoped, tag = 'output window, operand 0, single buffered']
    #allocation3 [shape = 's32[1]{0}', space=sflag, size = 0x4, scoped, tag = 'scoped memory for generator_forward.1']
    %12 = vsyncpa [#allocation3], 0
    // Predicated region
    $region2: #{generator_forward.1} parent=1 // pred_check
      _
    $region3: #{generator_forward.1} parent=1 // pred_check_branch
      %14 = sbr.rel (0) target = $region5
    $region4: #{generator_forward.1} parent=1 // pred_region
      _
    $region5: #{generator_forward.1} parent=1 // pred_fallthru
      _
    // Predicated region
    $region6: #{generator_forward.1} parent=1 // pred_check
      _
    $region7: #{generator_forward.1} parent=1 // pred_check_branch
      %16 = sbr.rel (0) target = $region9
    $region8: #{generator_forward.1} parent=1 // pred_region
      _
    $region9: #{generator_forward.1} parent=1 // pred_fallthru
      _
    // Predicated region
    $region10: #{generator_forward.1} parent=1 // pred_check
      _
    $region11: #{generator_forward.1} parent=1 // pred_check_branch
      %18 = sbr.rel (0) target = $region13
    $region12: #{generator_forward.1} parent=1 // pred_region
      _
    $region13: #{generator_forward.1} parent=1 // pred_fallthru
      _
    // Predicated region
    $region14: #{generator_forward.1} parent=1 // pred_check
      _
    $region15: #{generator_forward.1} parent=1 // pred_check_branch
      %20 = sbr.rel (0) target = $region17
    $region16: #{generator_forward.1} parent=1 // pred_region
      _
    $region17: #{generator_forward.1} parent=1 // pred_fallthru
      _
    // Predicated region
    $region18: #{generator_forward.1} parent=1 // pred_check
      _
    $region19: #{generator_forward.1} parent=1 // pred_check_branch
      %22 = sbr.rel (0) target = $region21
    $region20: #{generator_forward.1} parent=1 // pred_region
      _
    $region21: #{generator_forward.1} parent=1 // pred_fallthru
      _
    // Predicated region
    $region22: #{generator_forward.1} parent=1 // pred_check
      _
    $region23: #{generator_forward.1} parent=1 // pred_check_branch
      %24 = sbr.rel (0) target = $region25
    $region24: #{generator_forward.1} parent=1 // pred_region
      _
    $region25: #{generator_forward.1} parent=1 // pred_fallthru
      _
    // Predicated region
    $region26: #{generator_forward.1} parent=1 // pred_check
      _
    $region27: #{generator_forward.1} parent=1 // pred_check_branch
      %26 = sbr.rel (0) target = $region29
    $region28: #{generator_forward.1} parent=1 // pred_region
      _
    $region29: #{generator_forward.1} parent=1 // pred_fallthru
      _
    %v28 = vld [vmem:[%s0] sm:$0xff]
    %v29 = vld [vmem:[%s0 + $0x8] sm:$0xff]
    %v30 = vld [vmem:[%s0 + $0x10] sm:$0xff]
    %v31 = vld [vmem:[%s0 + $0x18] sm:$0xff]
    %v32 = vld [vmem:[%s0 + $0x20] sm:$0xff]
    %v33 = vld [vmem:[%s0 + $0x28] sm:$0xff]
    %v34 = vld [vmem:[%s0 + $0x30] sm:$0xff]
    %v35 = vld [vmem:[%s0 + $0x38] sm:$0xff]
    %v36 = vld [vmem:[%s0 + $0x40] sm:$0xff]
    %v37 = vld [vmem:[%s0 + $0x48] sm:$0xff]
    %v38 = vld [vmem:[%s0 + $0x50] sm:$0xff]
    %v39 = vld [vmem:[%s0 + $0x58] sm:$0xff]
    %v40 = vld [vmem:[%s0 + $0x60] sm:$0xff]
    %v41 = vld [vmem:[%s0 + $0x68] sm:$0xff]
    %v42 = vpack.c.bf16 %v35, %v28
    %v43 = vpack.c.bf16 %v36, %v29
    %v44 = vpack.c.bf16 %v37, %v30
    %v45 = vpack.c.bf16 %v38, %v31
    %v46 = vpack.c.bf16 %v39, %v32
    %v47 = vpack.c.bf16 %v40, %v33
    %v48 = vpack.c.bf16 %v41, %v34
    %v49 = vld [vmem:[%s1] sm:$0xff]
    %v50 = vld [vmem:[%s1 + $0x8] sm:$0xff]
    %v51 = vld [vmem:[%s1 + $0x10] sm:$0xff]
    %v52 = vld [vmem:[%s1 + $0x18] sm:$0xff]
    %v53 = vld [vmem:[%s1 + $0x20] sm:$0xff]
    %v54 = vld [vmem:[%s1 + $0x28] sm:$0xff]
    %v55 = vld [vmem:[%s1 + $0x30] sm:$0xff]
    %v56 = vld [vmem:[%s1 + $0x38] sm:$0xff]
    %v57 = vld [vmem:[%s1 + $0x40] sm:$0xff]
    %v58 = vld [vmem:[%s1 + $0x48] sm:$0xff]
    %v59 = vld [vmem:[%s1 + $0x50] sm:$0xff]
    %v60 = vld [vmem:[%s1 + $0x58] sm:$0xff]
    %v61 = vld [vmem:[%s1 + $0x60] sm:$0xff]
    %v62 = vld [vmem:[%s1 + $0x68] sm:$0xff]
    %v63 = vld [vmem:[%s1 + $0x70] sm:$0xff]
    %v64 = vld [vmem:[%s1 + $0x78] sm:$0xff]
    %v65 = vld [vmem:[%s1 + $0x80] sm:$0xff]
    %v66 = vld [vmem:[%s1 + $0x88] sm:$0xff]
    %v67 = vld [vmem:[%s1 + $0x90] sm:$0xff]
    %v68 = vld [vmem:[%s1 + $0x98] sm:$0xff]
    %v69 = vld [vmem:[%s1 + $0xa0] sm:$0xff]
    %v70 = vld [vmem:[%s1 + $0xa8] sm:$0xff]
    %v71 = vld [vmem:[%s1 + $0xb0] sm:$0xff]
    %v72 = vld [vmem:[%s1 + $0xb8] sm:$0xff]
    %v73 = vld [vmem:[%s1 + $0xc0] sm:$0xff]
    %v74 = vld [vmem:[%s1 + $0xc8] sm:$0xff]
    %v75 = vld [vmem:[%s1 + $0xd0] sm:$0xff]
    %v76 = vld [vmem:[%s1 + $0xd8] sm:$0xff]
    %v77 = vld [vmem:[%s1 + $0xe0] sm:$0xff]
    %v78 = vld [vmem:[%s1 + $0xe8] sm:$0xff]
    %v79 = vld [vmem:[%s1 + $0xf0] sm:$0xff]
    %v80 = vld [vmem:[%s1 + $0xf8] sm:$0xff]
    %v81 = vld [vmem:[%s1 + $0x100] sm:$0xff]
    %v82 = vld [vmem:[%s1 + $0x108] sm:$0xff]
    %v83 = vld [vmem:[%s1 + $0x110] sm:$0xff]
    %v84 = vld [vmem:[%s1 + $0x118] sm:$0xff]
    %v85 = vld [vmem:[%s1 + $0x120] sm:$0xff]
    %v86 = vld [vmem:[%s1 + $0x128] sm:$0xff]
    %v87 = vld [vmem:[%s1 + $0x130] sm:$0xff]
    %v88 = vld [vmem:[%s1 + $0x138] sm:$0xff]
    %v89 = vld [vmem:[%s1 + $0x140] sm:$0xff]
    %v90 = vld [vmem:[%s1 + $0x148] sm:$0xff]
    %v91 = vld [vmem:[%s1 + $0x150] sm:$0xff]
    %v92 = vld [vmem:[%s1 + $0x158] sm:$0xff]
    %v93 = vld [vmem:[%s1 + $0x160] sm:$0xff]
    %v94 = vld [vmem:[%s1 + $0x168] sm:$0xff]
    %v95 = vld [vmem:[%s1 + $0x170] sm:$0xff]
    %v96 = vld [vmem:[%s1 + $0x178] sm:$0xff]
    %v97 = vld [vmem:[%s1 + $0x180] sm:$0xff]
    %v98 = vld [vmem:[%s1 + $0x188] sm:$0xff]
    %v99 = vld [vmem:[%s1 + $0x190] sm:$0xff]
    %v100 = vld [vmem:[%s1 + $0x198] sm:$0xff]
    %v101 = vld [vmem:[%s1 + $0x1a0] sm:$0xff]
    %v102 = vld [vmem:[%s1 + $0x1a8] sm:$0xff]
    %v103 = vld [vmem:[%s1 + $0x1b0] sm:$0xff]
    %v104 = vld [vmem:[%s1 + $0x1b8] sm:$0xff]
    %v105 = vld [vmem:[%s1 + $0x1c0] sm:$0xff]
    %v106 = vld [vmem:[%s1 + $0x1c8] sm:$0xff]
    %v107 = vld [vmem:[%s1 + $0x1d0] sm:$0xff]
    %v108 = vld [vmem:[%s1 + $0x1d8] sm:$0xff]
    %v109 = vld [vmem:[%s1 + $0x1e0] sm:$0xff]
    %v110 = vld [vmem:[%s1 + $0x1e8] sm:$0xff]
    %v111 = vld [vmem:[%s1 + $0x1f0] sm:$0xff]
    %v112 = vld [vmem:[%s1 + $0x1f8] sm:$0xff]
    %v113 = vld [vmem:[%s1 + $0x200] sm:$0xff]
    %v114 = vld [vmem:[%s1 + $0x208] sm:$0xff]
    %v115 = vld [vmem:[%s1 + $0x210] sm:$0xff]
    %v116 = vld [vmem:[%s1 + $0x218] sm:$0xff]
    %v117 = vld [vmem:[%s1 + $0x220] sm:$0xff]
    %v118 = vld [vmem:[%s1 + $0x228] sm:$0xff]
    %v119 = vld [vmem:[%s1 + $0x230] sm:$0xff]
    %v120 = vld [vmem:[%s1 + $0x238] sm:$0xff]
    %v121 = vld [vmem:[%s1 + $0x240] sm:$0xff]
    %v122 = vld [vmem:[%s1 + $0x248] sm:$0xff]
    %v123 = vld [vmem:[%s1 + $0x250] sm:$0xff]
    %v124 = vld [vmem:[%s1 + $0x258] sm:$0xff]
    %v125 = vld [vmem:[%s1 + $0x260] sm:$0xff]
    %v126 = vld [vmem:[%s1 + $0x268] sm:$0xff]
    %v127 = vld [vmem:[%s1 + $0x270] sm:$0xff]
    %v128 = vld [vmem:[%s1 + $0x278] sm:$0xff]
    %v129 = vld [vmem:[%s1 + $0x280] sm:$0xff]
    %v130 = vld [vmem:[%s1 + $0x288] sm:$0xff]
    %v131 = vld [vmem:[%s1 + $0x290] sm:$0xff]
    %v132 = vld [vmem:[%s1 + $0x298] sm:$0xff]
    %v133 = vld [vmem:[%s1 + $0x2a0] sm:$0xff]
    %v134 = vld [vmem:[%s1 + $0x2a8] sm:$0xff]
    %v135 = vld [vmem:[%s1 + $0x2b0] sm:$0xff]
    %v136 = vld [vmem:[%s1 + $0x2b8] sm:$0xff]
    %v137 = vld [vmem:[%s1 + $0x2c0] sm:$0xff]
    %v138 = vld [vmem:[%s1 + $0x2c8] sm:$0xff]
    %v139 = vld [vmem:[%s1 + $0x2d0] sm:$0xff]
    %v140 = vld [vmem:[%s1 + $0x2d8] sm:$0xff]
    %v141 = vld [vmem:[%s1 + $0x2e0] sm:$0xff]
    %v142 = vld [vmem:[%s1 + $0x2e8] sm:$0xff]
    %v143 = vld [vmem:[%s1 + $0x2f0] sm:$0xff]
    %v144 = vld [vmem:[%s1 + $0x2f8] sm:$0xff]
    %v145 = vld [vmem:[%s1 + $0x300] sm:$0xff]
    %v146 = vld [vmem:[%s1 + $0x308] sm:$0xff]
    %v147 = vld [vmem:[%s2] sm:$0x3]
    %v149 = vlaneseq
    %v150 = vshrl.u32 %v149, 7
    %v151 = vsub.s32 0, %v150
    %v152 = vrot.slane %v147, %v151
    %v153 = vlaneseq
    %v154 = vshrl.u32 %v153, 7
    %v155 = vsub.s32 1, %v154
    %v156 = vrot.slane %v147, %v155
    %v257 = vunpack.c.l.b16 %v49
    %v258 = vunpack.c.h.b16 %v49
    %v259 = vunpack.c.l.b16 %v50
    %v260 = vunpack.c.h.b16 %v50
    %v261 = vunpack.c.l.b16 %v51
    %v262 = vunpack.c.h.b16 %v51
    %v263 = vunpack.c.l.b16 %v52
    %v264 = vunpack.c.h.b16 %v52
    %v265 = vunpack.c.l.b16 %v53
    %v266 = vunpack.c.h.b16 %v53
    %v267 = vunpack.c.l.b16 %v54
    %v268 = vunpack.c.h.b16 %v54
    %v269 = vunpack.c.l.b16 %v55
    %v270 = vunpack.c.h.b16 %v55
    %v271 = vunpack.c.l.b16 %v56
    %v272 = vunpack.c.h.b16 %v56
    %v273 = vunpack.c.l.b16 %v57
    %v274 = vunpack.c.h.b16 %v57
    %v275 = vunpack.c.l.b16 %v58
    %v276 = vunpack.c.h.b16 %v58
    %v277 = vunpack.c.l.b16 %v59
    %v278 = vunpack.c.h.b16 %v59
    %v279 = vunpack.c.l.b16 %v60
    %v280 = vunpack.c.h.b16 %v60
    %v281 = vunpack.c.l.b16 %v61
    %v282 = vunpack.c.h.b16 %v61
    %v283 = vunpack.c.l.b16 %v62
    %v284 = vunpack.c.h.b16 %v62
    %v285 = vunpack.c.l.b16 %v63
    %v286 = vunpack.c.h.b16 %v63
    %v287 = vunpack.c.l.b16 %v64
    %v288 = vunpack.c.h.b16 %v64
    %v289 = vunpack.c.l.b16 %v65
    %v290 = vunpack.c.h.b16 %v65
    %v291 = vunpack.c.l.b16 %v66
    %v292 = vunpack.c.h.b16 %v66
    %v293 = vunpack.c.l.b16 %v67
    %v294 = vunpack.c.h.b16 %v67
    %v295 = vunpack.c.l.b16 %v68
    %v296 = vunpack.c.h.b16 %v68
    %v297 = vunpack.c.l.b16 %v69
    %v298 = vunpack.c.h.b16 %v69
    %v299 = vunpack.c.l.b16 %v70
    %v300 = vunpack.c.h.b16 %v70
    %v301 = vunpack.c.l.b16 %v71
    %v302 = vunpack.c.h.b16 %v71
    %v303 = vunpack.c.l.b16 %v72
    %v304 = vunpack.c.h.b16 %v72
    %v305 = vunpack.c.l.b16 %v73
    %v306 = vunpack.c.h.b16 %v73
    %v307 = vunpack.c.l.b16 %v74
    %v308 = vunpack.c.h.b16 %v74
    %v309 = vunpack.c.l.b16 %v75
    %v310 = vunpack.c.h.b16 %v75
    %v311 = vunpack.c.l.b16 %v76
    %v312 = vunpack.c.h.b16 %v76
    %v313 = vunpack.c.l.b16 %v77
    %v314 = vunpack.c.h.b16 %v77
    %v315 = vunpack.c.l.b16 %v78
    %v316 = vunpack.c.h.b16 %v78
    %v317 = vunpack.c.l.b16 %v79
    %v318 = vunpack.c.h.b16 %v79
    %v319 = vunpack.c.l.b16 %v80
    %v320 = vunpack.c.h.b16 %v80
    %v321 = vunpack.c.l.b16 %v81
    %v322 = vunpack.c.h.b16 %v81
    %v323 = vunpack.c.l.b16 %v82
    %v324 = vunpack.c.h.b16 %v82
    %v325 = vunpack.c.l.b16 %v83
    %v326 = vunpack.c.h.b16 %v83
    %v327 = vunpack.c.l.b16 %v84
    %v328 = vunpack.c.h.b16 %v84
    %v329 = vunpack.c.l.b16 %v85
    %v330 = vunpack.c.h.b16 %v85
    %v331 = vunpack.c.l.b16 %v86
    %v332 = vunpack.c.h.b16 %v86
    %v333 = vunpack.c.l.b16 %v87
    %v334 = vunpack.c.h.b16 %v87
    %v335 = vunpack.c.l.b16 %v88
    %v336 = vunpack.c.h.b16 %v88
    %v337 = vunpack.c.l.b16 %v89
    %v338 = vunpack.c.h.b16 %v89
    %v339 = vunpack.c.l.b16 %v90
    %v340 = vunpack.c.h.b16 %v90
    %v341 = vunpack.c.l.b16 %v91
    %v342 = vunpack.c.h.b16 %v91
    %v343 = vunpack.c.l.b16 %v92
    %v344 = vunpack.c.h.b16 %v92
    %v345 = vunpack.c.l.b16 %v93
    %v346 = vunpack.c.h.b16 %v93
    %v347 = vunpack.c.l.b16 %v94
    %v348 = vunpack.c.h.b16 %v94
    %v349 = vunpack.c.l.b16 %v95
    %v350 = vunpack.c.h.b16 %v95
    %v351 = vunpack.c.l.b16 %v96
    %v352 = vunpack.c.h.b16 %v96
    %v353 = vunpack.c.l.b16 %v97
    %v354 = vunpack.c.h.b16 %v97
    %v355 = vunpack.c.l.b16 %v98
    %v356 = vunpack.c.h.b16 %v98
    %v357 = vunpack.c.l.b16 %v99
    %v358 = vunpack.c.h.b16 %v99
    %v359 = vunpack.c.l.b16 %v100
    %v360 = vunpack.c.h.b16 %v100
    %v361 = vunpack.c.l.b16 %v101
    %v362 = vunpack.c.h.b16 %v101
    %v363 = vunpack.c.l.b16 %v102
    %v364 = vunpack.c.h.b16 %v102
    %v365 = vunpack.c.l.b16 %v103
    %v366 = vunpack.c.h.b16 %v103
    %v367 = vunpack.c.l.b16 %v104
    %v368 = vunpack.c.h.b16 %v104
    %v369 = vunpack.c.l.b16 %v105
    %v370 = vunpack.c.h.b16 %v105
    %v371 = vunpack.c.l.b16 %v106
    %v372 = vunpack.c.h.b16 %v106
    %v373 = vunpack.c.l.b16 %v107
    %v374 = vunpack.c.h.b16 %v107
    %v375 = vunpack.c.l.b16 %v108
    %v376 = vunpack.c.h.b16 %v108
    %v377 = vunpack.c.l.b16 %v109
    %v378 = vunpack.c.h.b16 %v109
    %v379 = vunpack.c.l.b16 %v110
    %v380 = vunpack.c.h.b16 %v110
    %v381 = vunpack.c.l.b16 %v111
    %v382 = vunpack.c.h.b16 %v111
    %v383 = vunpack.c.l.b16 %v112
    %v384 = vunpack.c.h.b16 %v112
    %v385 = vunpack.c.l.b16 %v113
    %v386 = vunpack.c.h.b16 %v113
    %v387 = vunpack.c.l.b16 %v114
    %v388 = vunpack.c.h.b16 %v114
    %v389 = vunpack.c.l.b16 %v115
    %v390 = vunpack.c.h.b16 %v115
    %v391 = vunpack.c.l.b16 %v116
    %v392 = vunpack.c.h.b16 %v116
    %v393 = vunpack.c.l.b16 %v117
    %v394 = vunpack.c.h.b16 %v117
    %v395 = vunpack.c.l.b16 %v118
    %v396 = vunpack.c.h.b16 %v118
    %v397 = vunpack.c.l.b16 %v119
    %v398 = vunpack.c.h.b16 %v119
    %v399 = vunpack.c.l.b16 %v120
    %v400 = vunpack.c.h.b16 %v120
    %v401 = vunpack.c.l.b16 %v121
    %v402 = vunpack.c.h.b16 %v121
    %v403 = vunpack.c.l.b16 %v122
    %v404 = vunpack.c.h.b16 %v122
    %v405 = vunpack.c.l.b16 %v123
    %v406 = vunpack.c.h.b16 %v123
    %v407 = vunpack.c.l.b16 %v124
    %v408 = vunpack.c.h.b16 %v124
    %v409 = vunpack.c.l.b16 %v125
    %v410 = vunpack.c.h.b16 %v125
    %v411 = vunpack.c.l.b16 %v126
    %v412 = vunpack.c.h.b16 %v126
    %v413 = vunpack.c.l.b16 %v127
    %v414 = vunpack.c.h.b16 %v127
    %v415 = vunpack.c.l.b16 %v128
    %v416 = vunpack.c.h.b16 %v128
    %v417 = vunpack.c.l.b16 %v129
    %v418 = vunpack.c.h.b16 %v129
    %v419 = vunpack.c.l.b16 %v130
    %v420 = vunpack.c.h.b16 %v130
    %v421 = vunpack.c.l.b16 %v131
    %v422 = vunpack.c.h.b16 %v131
    %v423 = vunpack.c.l.b16 %v132
    %v424 = vunpack.c.h.b16 %v132
    %v425 = vunpack.c.l.b16 %v133
    %v426 = vunpack.c.h.b16 %v133
    %v427 = vunpack.c.l.b16 %v134
    %v428 = vunpack.c.h.b16 %v134
    %v429 = vunpack.c.l.b16 %v135
    %v430 = vunpack.c.h.b16 %v135
    %v431 = vunpack.c.l.b16 %v136
    %v432 = vunpack.c.h.b16 %v136
    %v433 = vunpack.c.l.b16 %v137
    %v434 = vunpack.c.h.b16 %v137
    %v435 = vunpack.c.l.b16 %v138
    %v436 = vunpack.c.h.b16 %v138
    %v437 = vunpack.c.l.b16 %v139
    %v438 = vunpack.c.h.b16 %v139
    %v439 = vunpack.c.l.b16 %v140
    %v440 = vunpack.c.h.b16 %v140
    %v441 = vunpack.c.l.b16 %v141
    %v442 = vunpack.c.h.b16 %v141
    %v443 = vunpack.c.l.b16 %v142
    %v444 = vunpack.c.h.b16 %v142
    %v445 = vunpack.c.l.b16 %v143
    %v446 = vunpack.c.h.b16 %v143
    %v447 = vunpack.c.l.b16 %v144
    %v448 = vunpack.c.h.b16 %v144
    %v449 = vunpack.c.l.b16 %v145
    %v450 = vunpack.c.h.b16 %v145
    %v451 = vunpack.c.l.b16 %v146
    %v452 = vunpack.c.h.b16 %v146
    %v453 = vpack.c.b16 %v259, %v257
    %v454 = vpack.c.b16 %v260, %v258
    %v455 = vpack.c.b16 %v263, %v261
    %v456 = vpack.c.b16 %v264, %v262
    %v457 = vpack.c.b16 %v267, %v265
    %v458 = vpack.c.b16 %v268, %v266
    %v459 = vpack.c.b16 %v271, %v269
    %v460 = vpack.c.b16 %v272, %v270
    %v461 = vpack.c.b16 %v275, %v273
    %v462 = vpack.c.b16 %v276, %v274
    %v463 = vpack.c.b16 %v279, %v277
    %v464 = vpack.c.b16 %v280, %v278
    %v465 = vpack.c.b16 %v283, %v281
    %v466 = vpack.c.b16 %v284, %v282
    %v467 = vpack.c.b16 %v287, %v285
    %v468 = vpack.c.b16 %v288, %v286
    %v469 = vpack.c.b16 %v291, %v289
    %v470 = vpack.c.b16 %v292, %v290
    %v471 = vpack.c.b16 %v295, %v293
    %v472 = vpack.c.b16 %v296, %v294
    %v473 = vpack.c.b16 %v299, %v297
    %v474 = vpack.c.b16 %v300, %v298
    %v475 = vpack.c.b16 %v303, %v301
    %v476 = vpack.c.b16 %v304, %v302
    %v477 = vpack.c.b16 %v307, %v305
    %v478 = vpack.c.b16 %v308, %v306
    %v479 = vpack.c.b16 %v311, %v309
    %v480 = vpack.c.b16 %v312, %v310
    %v481 = vpack.c.b16 %v315, %v313
    %v482 = vpack.c.b16 %v316, %v314
    %v483 = vpack.c.b16 %v319, %v317
    %v484 = vpack.c.b16 %v320, %v318
    %v485 = vpack.c.b16 %v323, %v321
    %v486 = vpack.c.b16 %v324, %v322
    %v487 = vpack.c.b16 %v327, %v325
    %v488 = vpack.c.b16 %v328, %v326
    %v489 = vpack.c.b16 %v331, %v329
    %v490 = vpack.c.b16 %v332, %v330
    %v491 = vpack.c.b16 %v335, %v333
    %v492 = vpack.c.b16 %v336, %v334
    %v493 = vpack.c.b16 %v339, %v337
    %v494 = vpack.c.b16 %v340, %v338
    %v495 = vpack.c.b16 %v343, %v341
    %v496 = vpack.c.b16 %v344, %v342
    %v497 = vpack.c.b16 %v347, %v345
    %v498 = vpack.c.b16 %v348, %v346
    %v499 = vpack.c.b16 %v351, %v349
    %v500 = vpack.c.b16 %v352, %v350
    %v501 = vpack.c.b16 %v355, %v353
    %v502 = vpack.c.b16 %v356, %v354
    %v503 = vpack.c.b16 %v359, %v357
    %v504 = vpack.c.b16 %v360, %v358
    %v505 = vpack.c.b16 %v363, %v361
    %v506 = vpack.c.b16 %v364, %v362
    %v507 = vpack.c.b16 %v367, %v365
    %v508 = vpack.c.b16 %v368, %v366
    %v509 = vpack.c.b16 %v371, %v369
    %v510 = vpack.c.b16 %v372, %v370
    %v511 = vpack.c.b16 %v375, %v373
    %v512 = vpack.c.b16 %v376, %v374
    %v513 = vpack.c.b16 %v379, %v377
    %v514 = vpack.c.b16 %v380, %v378
    %v515 = vpack.c.b16 %v383, %v381
    %v516 = vpack.c.b16 %v384, %v382
    %v517 = vpack.c.b16 %v387, %v385
    %v518 = vpack.c.b16 %v388, %v386
    %v519 = vpack.c.b16 %v391, %v389
    %v520 = vpack.c.b16 %v392, %v390
    %v521 = vpack.c.b16 %v395, %v393
    %v522 = vpack.c.b16 %v396, %v394
    %v523 = vpack.c.b16 %v399, %v397
    %v524 = vpack.c.b16 %v400, %v398
    %v525 = vpack.c.b16 %v403, %v401
    %v526 = vpack.c.b16 %v404, %v402
    %v527 = vpack.c.b16 %v407, %v405
    %v528 = vpack.c.b16 %v408, %v406
    %v529 = vpack.c.b16 %v411, %v409
    %v530 = vpack.c.b16 %v412, %v410
    %v531 = vpack.c.b16 %v415, %v413
    %v532 = vpack.c.b16 %v416, %v414
    %v533 = vpack.c.b16 %v419, %v417
    %v534 = vpack.c.b16 %v420, %v418
    %v535 = vpack.c.b16 %v423, %v421
    %v536 = vpack.c.b16 %v424, %v422
    %v537 = vpack.c.b16 %v427, %v425
    %v538 = vpack.c.b16 %v428, %v426
    %v539 = vpack.c.b16 %v431, %v429
    %v540 = vpack.c.b16 %v432, %v430
    %v541 = vpack.c.b16 %v435, %v433
    %v542 = vpack.c.b16 %v436, %v434
    %v543 = vpack.c.b16 %v439, %v437
    %v544 = vpack.c.b16 %v440, %v438
    %v545 = vpack.c.b16 %v443, %v441
    %v546 = vpack.c.b16 %v444, %v442
    %v547 = vpack.c.b16 %v447, %v445
    %v548 = vpack.c.b16 %v448, %v446
    %v549 = vpack.c.b16 %v451, %v449
    %v550 = vpack.c.b16 %v452, %v450
    %vm649 = vcmask 130048
    %v651 = vsel %vm649, %v48, 0
    %653 = vmatprep.subr.bf16.mxu0 %v454
    %654 = vmatpush1.bf16.msra.mxu0 %v453
    %655 = vmatprep.subr.bf16.mxu0 %v456
    %656 = vmatpush1.bf16.msra.mxu0 %v455
    %657 = vmatprep.subr.bf16.mxu0 %v458
    %658 = vmatpush1.bf16.msra.mxu0 %v457
    %659 = vmatprep.subr.bf16.mxu0 %v460
    %660 = vmatpush1.bf16.msra.mxu0 %v459
    %661 = vmatprep.subr.bf16.mxu0 %v462
    %662 = vmatpush1.bf16.msra.mxu0 %v461
    %663 = vmatprep.subr.bf16.mxu0 %v464
    %664 = vmatpush1.bf16.msra.mxu0 %v463
    %665 = vmatprep.subr.bf16.mxu0 %v466
    %666 = vmatpush1.bf16.msra.mxu0 %v465
    %667 = vmatprep.subr.bf16.mxu0 %v468
    %668 = vmatpush1.bf16.msra.mxu0 %v467
    %669 = vmatprep.subr.bf16.mxu0 %v470
    %670 = vmatpush1.bf16.msra.mxu0 %v469
    %671 = vmatprep.subr.bf16.mxu0 %v472
    %672 = vmatpush1.bf16.msra.mxu0 %v471
    %673 = vmatprep.subr.bf16.mxu0 %v474
    %674 = vmatpush1.bf16.msra.mxu0 %v473
    %675 = vmatprep.subr.bf16.mxu0 %v476
    %676 = vmatpush1.bf16.msra.mxu0 %v475
    %677 = vmatprep.subr.bf16.mxu0 %v478
    %678 = vmatpush1.bf16.msra.mxu0 %v477
    %679 = vmatprep.subr.bf16.mxu0 %v480
    %680 = vmatpush1.bf16.msra.mxu0 %v479
    %681 = vmatprep.subr.bf16.mxu0 %v482
    %682 = vmatpush1.bf16.msra.mxu0 %v481
    %683 = vmatprep.subr.bf16.mxu0 %v484
    %684 = vmatpush1.bf16.msra.mxu0 %v483
    %685 = vmatprep.mubr.bf16.mxu0 %v43
    %686 = vmatmul.mubr.bf16.gmra.mrb[0].mxu0 %v42
    %v687 = vpop.f32.mrb[0].mxu0
    %v688 = vadd.f32 %v152, %v687
    %v689 = vpop.f32.mrb[0].mxu0
    %v690 = vadd.f32 %v156, %v689
    %v691 = vpop.f32.mrb[0].mxu0
    %v692 = vadd.f32 %v152, %v691
    %v693 = vpop.f32.mrb[0].mxu0
    %v694 = vadd.f32 %v156, %v693
    %695 = vdwg.mxu0
    %696 = vmatprep.subr.bf16.mxu0 %v486
    %697 = vmatpush1.bf16.msra.mxu0 %v485
    %698 = vmatprep.subr.bf16.mxu0 %v488
    %699 = vmatpush1.bf16.msra.mxu0 %v487
    %700 = vmatprep.subr.bf16.mxu0 %v490
    %701 = vmatpush1.bf16.msra.mxu0 %v489
    %702 = vmatprep.subr.bf16.mxu0 %v492
    %703 = vmatpush1.bf16.msra.mxu0 %v491
    %704 = vmatprep.subr.bf16.mxu0 %v494
    %705 = vmatpush1.bf16.msra.mxu0 %v493
    %706 = vmatprep.subr.bf16.mxu0 %v496
    %707 = vmatpush1.bf16.msra.mxu0 %v495
    %708 = vmatprep.subr.bf16.mxu0 %v498
    %709 = vmatpush1.bf16.msra.mxu0 %v497
    %710 = vmatprep.subr.bf16.mxu0 %v500
    %711 = vmatpush1.bf16.msra.mxu0 %v499
    %712 = vmatprep.subr.bf16.mxu0 %v502
    %713 = vmatpush1.bf16.msra.mxu0 %v501
    %714 = vmatprep.subr.bf16.mxu0 %v504
    %715 = vmatpush1.bf16.msra.mxu0 %v503
    %716 = vmatprep.subr.bf16.mxu0 %v506
    %717 = vmatpush1.bf16.msra.mxu0 %v505
    %718 = vmatprep.subr.bf16.mxu0 %v508
    %719 = vmatpush1.bf16.msra.mxu0 %v507
    %720 = vmatprep.subr.bf16.mxu0 %v510
    %721 = vmatpush1.bf16.msra.mxu0 %v509
    %722 = vmatprep.subr.bf16.mxu0 %v512
    %723 = vmatpush1.bf16.msra.mxu0 %v511
    %724 = vmatprep.subr.bf16.mxu0 %v514
    %725 = vmatpush1.bf16.msra.mxu0 %v513
    %726 = vmatprep.subr.bf16.mxu0 %v516
    %727 = vmatpush1.bf16.msra.mxu0 %v515
    %728 = vmatprep.mubr.bf16.mxu0 %v45
    %729 = vmatmul.mubr.bf16.gmra.mrb[0].mxu0 %v44
    %v730 = vpop.f32.mrb[0].mxu0
    %v731 = vadd.f32 %v688, %v730
    %v732 = vpop.f32.mrb[0].mxu0
    %v733 = vadd.f32 %v690, %v732
    %v734 = vpop.f32.mrb[0].mxu0
    %v735 = vadd.f32 %v692, %v734
    %v736 = vpop.f32.mrb[0].mxu0
    %v737 = vadd.f32 %v694, %v736
    %738 = vdwg.mxu0
    %739 = vmatprep.subr.bf16.mxu0 %v518
    %740 = vmatpush1.bf16.msra.mxu0 %v517
    %741 = vmatprep.subr.bf16.mxu0 %v520
    %742 = vmatpush1.bf16.msra.mxu0 %v519
    %743 = vmatprep.subr.bf16.mxu0 %v522
    %744 = vmatpush1.bf16.msra.mxu0 %v521
    %745 = vmatprep.subr.bf16.mxu0 %v524
    %746 = vmatpush1.bf16.msra.mxu0 %v523
    %747 = vmatprep.subr.bf16.mxu0 %v526
    %748 = vmatpush1.bf16.msra.mxu0 %v525
    %749 = vmatprep.subr.bf16.mxu0 %v528
    %750 = vmatpush1.bf16.msra.mxu0 %v527
    %751 = vmatprep.subr.bf16.mxu0 %v530
    %752 = vmatpush1.bf16.msra.mxu0 %v529
    %753 = vmatprep.subr.bf16.mxu0 %v532
    %754 = vmatpush1.bf16.msra.mxu0 %v531
    %755 = vmatprep.subr.bf16.mxu0 %v534
    %756 = vmatpush1.bf16.msra.mxu0 %v533
    %757 = vmatprep.subr.bf16.mxu0 %v536
    %758 = vmatpush1.bf16.msra.mxu0 %v535
    %759 = vmatprep.subr.bf16.mxu0 %v538
    %760 = vmatpush1.bf16.msra.mxu0 %v537
    %761 = vmatprep.subr.bf16.mxu0 %v540
    %762 = vmatpush1.bf16.msra.mxu0 %v539
    %763 = vmatprep.subr.bf16.mxu0 %v542
    %764 = vmatpush1.bf16.msra.mxu0 %v541
    %765 = vmatprep.subr.bf16.mxu0 %v544
    %766 = vmatpush1.bf16.msra.mxu0 %v543
    %767 = vmatprep.subr.bf16.mxu0 %v546
    %768 = vmatpush1.bf16.msra.mxu0 %v545
    %769 = vmatprep.subr.bf16.mxu0 %v548
    %770 = vmatpush1.bf16.msra.mxu0 %v547
    %771 = vmatprep.mubr.bf16.mxu0 %v47
    %772 = vmatmul.mubr.bf16.gmra.mrb[0].mxu0 %v46
    %v773 = vpop.f32.mrb[0].mxu0
    %v774 = vadd.f32 %v731, %v773
    %v775 = vpop.f32.mrb[0].mxu0
    %v776 = vadd.f32 %v733, %v775
    %v777 = vpop.f32.mrb[0].mxu0
    %v778 = vadd.f32 %v735, %v777
    %v779 = vpop.f32.mrb[0].mxu0
    %v780 = vadd.f32 %v737, %v779
    %781 = vdwg.mxu0
    %782 = vmatprep.subr.bf16.mxu0 %v550
    %783 = vmatpush1.bf16.msra.mxu0 %v549
    %784 = vmatprep.subr.bf16.mxu0 0
    %785 = vmatpush1.bf16.msra.mxu0 0
    %786 = vmatprep.subr.bf16.mxu0 0
    %787 = vmatpush1.bf16.msra.mxu0 0
    %788 = vmatprep.subr.bf16.mxu0 0
    %789 = vmatpush1.bf16.msra.mxu0 0
    %790 = vmatprep.subr.bf16.mxu0 0
    %791 = vmatpush1.bf16.msra.mxu0 0
    %792 = vmatprep.subr.bf16.mxu0 0
    %793 = vmatpush1.bf16.msra.mxu0 0
    %794 = vmatprep.subr.bf16.mxu0 0
    %795 = vmatpush1.bf16.msra.mxu0 0
    %796 = vmatprep.subr.bf16.mxu0 0
    %797 = vmatpush1.bf16.msra.mxu0 0
    %798 = vmatprep.subr.bf16.mxu0 0
    %799 = vmatpush1.bf16.msra.mxu0 0
    %800 = vmatprep.subr.bf16.mxu0 0
    %801 = vmatpush1.bf16.msra.mxu0 0
    %802 = vmatprep.subr.bf16.mxu0 0
    %803 = vmatpush1.bf16.msra.mxu0 0
    %804 = vmatprep.subr.bf16.mxu0 0
    %805 = vmatpush1.bf16.msra.mxu0 0
    %806 = vmatprep.subr.bf16.mxu0 0
    %807 = vmatpush1.bf16.msra.mxu0 0
    %808 = vmatprep.subr.bf16.mxu0 0
    %809 = vmatpush1.bf16.msra.mxu0 0
    %810 = vmatprep.subr.bf16.mxu0 0
    %811 = vmatpush1.bf16.msra.mxu0 0
    %812 = vmatprep.subr.bf16.mxu0 0
    %813 = vmatpush1.bf16.msra.mxu0 0
    %814 = vmatprep.mubr.bf16.mxu0 0
    %815 = vmatmul.mubr.bf16.gmra.mrb[0].mxu0 %v651
    %v816 = vpop.f32.mrb[0].mxu0
    %v817 = vadd.f32 %v774, %v816
    %v818 = vpop.f32.mrb[0].mxu0
    %v819 = vadd.f32 %v776, %v818
    %v820 = vpop.f32.mrb[0].mxu0
    %v821 = vadd.f32 %v778, %v820
    %v822 = vpop.f32.mrb[0].mxu0
    %v823 = vadd.f32 %v780, %v822
    %824 = vdwg.mxu0
    %v825 = vmax.f32 %v817, 0.0
    %v826 = vmax.f32 %v819, 0.0
    %v827 = vmax.f32 %v821, 0.0
    %v828 = vmax.f32 %v823, 0.0
    %v829 = vpack.c.bf16 %v827, %v825
    %v830 = vpack.c.bf16 %v828, %v826
    %v831 = vld [vmem:[%s3] sm:$0xff]
    %v832 = vld [vmem:[%s3 + $0x8] sm:$0xff]
    %v833 = vld [vmem:[%s3 + $0x10] sm:$0xff]
    %v834 = vld [vmem:[%s3 + $0x18] sm:$0xff]
    %v835 = vld [vmem:[%s3 + $0x20] sm:$0xff]
    %v836 = vld [vmem:[%s3 + $0x28] sm:$0xff]
    %v837 = vld [vmem:[%s3 + $0x30] sm:$0xff]
    %v838 = vld [vmem:[%s3 + $0x38] sm:$0xff]
    %v839 = vld [vmem:[%s3 + $0x40] sm:$0xff]
    %v840 = vld [vmem:[%s3 + $0x48] sm:$0xff]
    %v841 = vld [vmem:[%s3 + $0x50] sm:$0xff]
    %v842 = vld [vmem:[%s3 + $0x58] sm:$0xff]
    %v843 = vld [vmem:[%s3 + $0x60] sm:$0xff]
    %v844 = vld [vmem:[%s3 + $0x68] sm:$0xff]
    %v845 = vld [vmem:[%s3 + $0x70] sm:$0xff]
    %v846 = vld [vmem:[%s3 + $0x78] sm:$0xff]
    %v847 = vld [vmem:[%s3 + $0x80] sm:$0xff]
    %v848 = vld [vmem:[%s3 + $0x88] sm:$0xff]
    %v849 = vld [vmem:[%s3 + $0x90] sm:$0xff]
    %v850 = vld [vmem:[%s3 + $0x98] sm:$0xff]
    %v851 = vld [vmem:[%s3 + $0xa0] sm:$0xff]
    %v852 = vld [vmem:[%s3 + $0xa8] sm:$0xff]
    %v853 = vld [vmem:[%s3 + $0xb0] sm:$0xff]
    %v854 = vld [vmem:[%s3 + $0xb8] sm:$0xff]
    %v855 = vld [vmem:[%s3 + $0xc0] sm:$0xff]
    %v856 = vld [vmem:[%s3 + $0xc8] sm:$0xff]
    %v857 = vld [vmem:[%s3 + $0xd0] sm:$0xff]
    %v858 = vld [vmem:[%s3 + $0xd8] sm:$0xff]
    %v859 = vld [vmem:[%s3 + $0xe0] sm:$0xff]
    %v860 = vld [vmem:[%s3 + $0xe8] sm:$0xff]
    %v861 = vld [vmem:[%s3 + $0xf0] sm:$0xff]
    %v862 = vld [vmem:[%s3 + $0xf8] sm:$0xff]
    %v863 = vld [vmem:[%s4] sm:$0x3]
    %v865 = vlaneseq
    %v866 = vshrl.u32 %v865, 7
    %v867 = vsub.s32 0, %v866
    %v868 = vrot.slane %v863, %v867
    %v869 = vlaneseq
    %v870 = vshrl.u32 %v869, 7
    %v871 = vsub.s32 1, %v870
    %v872 = vrot.slane %v863, %v871
    %v907 = vunpack.c.l.b16 %v831
    %v908 = vunpack.c.h.b16 %v831
    %v909 = vunpack.c.l.b16 %v832
    %v910 = vunpack.c.h.b16 %v832
    %v911 = vunpack.c.l.b16 %v833
    %v912 = vunpack.c.h.b16 %v833
    %v913 = vunpack.c.l.b16 %v834
    %v914 = vunpack.c.h.b16 %v834
    %v915 = vunpack.c.l.b16 %v835
    %v916 = vunpack.c.h.b16 %v835
    %v917 = vunpack.c.l.b16 %v836
    %v918 = vunpack.c.h.b16 %v836
    %v919 = vunpack.c.l.b16 %v837
    %v920 = vunpack.c.h.b16 %v837
    %v921 = vunpack.c.l.b16 %v838
    %v922 = vunpack.c.h.b16 %v838
    %v923 = vunpack.c.l.b16 %v839
    %v924 = vunpack.c.h.b16 %v839
    %v925 = vunpack.c.l.b16 %v840
    %v926 = vunpack.c.h.b16 %v840
    %v927 = vunpack.c.l.b16 %v841
    %v928 = vunpack.c.h.b16 %v841
    %v929 = vunpack.c.l.b16 %v842
    %v930 = vunpack.c.h.b16 %v842
    %v931 = vunpack.c.l.b16 %v843
    %v932 = vunpack.c.h.b16 %v843
    %v933 = vunpack.c.l.b16 %v844
    %v934 = vunpack.c.h.b16 %v844
    %v935 = vunpack.c.l.b16 %v845
    %v936 = vunpack.c.h.b16 %v845
    %v937 = vunpack.c.l.b16 %v846
    %v938 = vunpack.c.h.b16 %v846
    %v939 = vunpack.c.l.b16 %v847
    %v940 = vunpack.c.h.b16 %v847
    %v941 = vunpack.c.l.b16 %v848
    %v942 = vunpack.c.h.b16 %v848
    %v943 = vunpack.c.l.b16 %v849
    %v944 = vunpack.c.h.b16 %v849
    %v945 = vunpack.c.l.b16 %v850
    %v946 = vunpack.c.h.b16 %v850
    %v947 = vunpack.c.l.b16 %v851
    %v948 = vunpack.c.h.b16 %v851
    %v949 = vunpack.c.l.b16 %v852
    %v950 = vunpack.c.h.b16 %v852
    %v951 = vunpack.c.l.b16 %v853
    %v952 = vunpack.c.h.b16 %v853
    %v953 = vunpack.c.l.b16 %v854
    %v954 = vunpack.c.h.b16 %v854
    %v955 = vunpack.c.l.b16 %v855
    %v956 = vunpack.c.h.b16 %v855
    %v957 = vunpack.c.l.b16 %v856
    %v958 = vunpack.c.h.b16 %v856
    %v959 = vunpack.c.l.b16 %v857
    %v960 = vunpack.c.h.b16 %v857
    %v961 = vunpack.c.l.b16 %v858
    %v962 = vunpack.c.h.b16 %v858
    %v963 = vunpack.c.l.b16 %v859
    %v964 = vunpack.c.h.b16 %v859
    %v965 = vunpack.c.l.b16 %v860
    %v966 = vunpack.c.h.b16 %v860
    %v967 = vunpack.c.l.b16 %v861
    %v968 = vunpack.c.h.b16 %v861
    %v969 = vunpack.c.l.b16 %v862
    %v970 = vunpack.c.h.b16 %v862
    %v971 = vpack.c.b16 %v909, %v907
    %v972 = vpack.c.b16 %v910, %v908
    %v973 = vpack.c.b16 %v913, %v911
    %v974 = vpack.c.b16 %v914, %v912
    %v975 = vpack.c.b16 %v917, %v915
    %v976 = vpack.c.b16 %v918, %v916
    %v977 = vpack.c.b16 %v921, %v919
    %v978 = vpack.c.b16 %v922, %v920
    %v979 = vpack.c.b16 %v925, %v923
    %v980 = vpack.c.b16 %v926, %v924
    %v981 = vpack.c.b16 %v929, %v927
    %v982 = vpack.c.b16 %v930, %v928
    %v983 = vpack.c.b16 %v933, %v931
    %v984 = vpack.c.b16 %v934, %v932
    %v985 = vpack.c.b16 %v937, %v935
    %v986 = vpack.c.b16 %v938, %v936
    %v987 = vpack.c.b16 %v941, %v939
    %v988 = vpack.c.b16 %v942, %v940
    %v989 = vpack.c.b16 %v945, %v943
    %v990 = vpack.c.b16 %v946, %v944
    %v991 = vpack.c.b16 %v949, %v947
    %v992 = vpack.c.b16 %v950, %v948
    %v993 = vpack.c.b16 %v953, %v951
    %v994 = vpack.c.b16 %v954, %v952
    %v995 = vpack.c.b16 %v957, %v955
    %v996 = vpack.c.b16 %v958, %v956
    %v997 = vpack.c.b16 %v961, %v959
    %v998 = vpack.c.b16 %v962, %v960
    %v999 = vpack.c.b16 %v965, %v963
    %v1000 = vpack.c.b16 %v966, %v964
    %v1001 = vpack.c.b16 %v969, %v967
    %v1002 = vpack.c.b16 %v970, %v968
    %1035 = vmatprep.subr.bf16.mxu0 %v972
    %1036 = vmatpush1.bf16.msra.mxu0 %v971
    %1037 = vmatprep.subr.bf16.mxu0 %v974
    %1038 = vmatpush1.bf16.msra.mxu0 %v973
    %1039 = vmatprep.subr.bf16.mxu0 %v976
    %1040 = vmatpush1.bf16.msra.mxu0 %v975
    %1041 = vmatprep.subr.bf16.mxu0 %v978
    %1042 = vmatpush1.bf16.msra.mxu0 %v977
    %1043 = vmatprep.subr.bf16.mxu0 %v980
    %1044 = vmatpush1.bf16.msra.mxu0 %v979
    %1045 = vmatprep.subr.bf16.mxu0 %v982
    %1046 = vmatpush1.bf16.msra.mxu0 %v981
    %1047 = vmatprep.subr.bf16.mxu0 %v984
    %1048 = vmatpush1.bf16.msra.mxu0 %v983
    %1049 = vmatprep.subr.bf16.mxu0 %v986
    %1050 = vmatpush1.bf16.msra.mxu0 %v985
    %1051 = vmatprep.subr.bf16.mxu0 %v988
    %1052 = vmatpush1.bf16.msra.mxu0 %v987
    %1053 = vmatprep.subr.bf16.mxu0 %v990
    %1054 = vmatpush1.bf16.msra.mxu0 %v989
    %1055 = vmatprep.subr.bf16.mxu0 %v992
    %1056 = vmatpush1.bf16.msra.mxu0 %v991
    %1057 = vmatprep.subr.bf16.mxu0 %v994
    %1058 = vmatpush1.bf16.msra.mxu0 %v993
    %1059 = vmatprep.subr.bf16.mxu0 %v996
    %1060 = vmatpush1.bf16.msra.mxu0 %v995
    %1061 = vmatprep.subr.bf16.mxu0 %v998
    %1062 = vmatpush1.bf16.msra.mxu0 %v997
    %1063 = vmatprep.subr.bf16.mxu0 %v1000
    %1064 = vmatpush1.bf16.msra.mxu0 %v999
    %1065 = vmatprep.subr.bf16.mxu0 %v1002
    %1066 = vmatpush1.bf16.msra.mxu0 %v1001
    %1067 = vmatprep.mubr.bf16.mxu0 %v830
    %1068 = vmatmul.mubr.bf16.gmra.mrb[0].mxu0 %v829
    %v1069 = vpop.f32.mrb[0].mxu0
    %v1070 = vadd.f32 %v868, %v1069
    %v1071 = vpop.f32.mrb[0].mxu0
    %v1072 = vadd.f32 %v872, %v1071
    %v1073 = vpop.f32.mrb[0].mxu0
    %v1074 = vadd.f32 %v868, %v1073
    %v1075 = vpop.f32.mrb[0].mxu0
    %v1076 = vadd.f32 %v872, %v1075
    %1077 = vdwg.mxu0
    %v1078 = vmax.f32 %v1070, 0.0
    %v1079 = vmax.f32 %v1072, 0.0
    %v1080 = vmax.f32 %v1074, 0.0
    %v1081 = vmax.f32 %v1076, 0.0
    %v1082 = vpack.c.bf16 %v1080, %v1078
    %v1083 = vpack.c.bf16 %v1081, %v1079
    %v1084 = vld [vmem:[%s5] sm:$0xff]
    %v1085 = vld [vmem:[%s5 + $0x8] sm:$0xff]
    %v1086 = vld [vmem:[%s5 + $0x10] sm:$0xff]
    %v1087 = vld [vmem:[%s5 + $0x18] sm:$0xf]
    %v1088 = vld [vmem:[%s5 + $0x1c] sm:$0xff]
    %v1089 = vld [vmem:[%s5 + $0x24] sm:$0xff]
    %v1090 = vld [vmem:[%s5 + $0x2c] sm:$0xff]
    %v1091 = vld [vmem:[%s5 + $0x34] sm:$0xf]
    %v1092 = vld [vmem:[%s5 + $0x38] sm:$0xff]
    %v1093 = vld [vmem:[%s5 + $0x40] sm:$0xff]
    %v1094 = vld [vmem:[%s5 + $0x48] sm:$0xff]
    %v1095 = vld [vmem:[%s5 + $0x50] sm:$0xf]
    %v1096 = vld [vmem:[%s5 + $0x54] sm:$0xff]
    %v1097 = vld [vmem:[%s5 + $0x5c] sm:$0xff]
    %v1098 = vld [vmem:[%s5 + $0x64] sm:$0xff]
    %v1099 = vld [vmem:[%s5 + $0x6c] sm:$0xf]
    %v1100 = vld [vmem:[%s5 + $0x70] sm:$0xff]
    %v1101 = vld [vmem:[%s5 + $0x78] sm:$0xff]
    %v1102 = vld [vmem:[%s5 + $0x80] sm:$0xff]
    %v1103 = vld [vmem:[%s5 + $0x88] sm:$0xf]
    %v1104 = vld [vmem:[%s5 + $0x8c] sm:$0xff]
    %v1105 = vld [vmem:[%s5 + $0x94] sm:$0xff]
    %v1106 = vld [vmem:[%s5 + $0x9c] sm:$0xff]
    %v1107 = vld [vmem:[%s5 + $0xa4] sm:$0xf]
    %v1108 = vld [vmem:[%s5 + $0xa8] sm:$0xff]
    %v1109 = vld [vmem:[%s5 + $0xb0] sm:$0xff]
    %v1110 = vld [vmem:[%s5 + $0xb8] sm:$0xff]
    %v1111 = vld [vmem:[%s5 + $0xc0] sm:$0xf]
    %v1112 = vld [vmem:[%s5 + $0xc4] sm:$0xff]
    %v1113 = vld [vmem:[%s5 + $0xcc] sm:$0xff]
    %v1114 = vld [vmem:[%s5 + $0xd4] sm:$0xff]
    %v1115 = vld [vmem:[%s5 + $0xdc] sm:$0xf]
    %v1116 = vld [vmem:[%s5 + $0xe0] sm:$0xff]
    %v1117 = vld [vmem:[%s5 + $0xe8] sm:$0xff]
    %v1118 = vld [vmem:[%s5 + $0xf0] sm:$0xff]
    %v1119 = vld [vmem:[%s5 + $0xf8] sm:$0xf]
    %v1120 = vld [vmem:[%s5 + $0xfc] sm:$0xff]
    %v1121 = vld [vmem:[%s5 + $0x104] sm:$0xff]
    %v1122 = vld [vmem:[%s5 + $0x10c] sm:$0xff]
    %v1123 = vld [vmem:[%s5 + $0x114] sm:$0xf]
    %v1124 = vld [vmem:[%s5 + $0x118] sm:$0xff]
    %v1125 = vld [vmem:[%s5 + $0x120] sm:$0xff]
    %v1126 = vld [vmem:[%s5 + $0x128] sm:$0xff]
    %v1127 = vld [vmem:[%s5 + $0x130] sm:$0xf]
    %v1128 = vld [vmem:[%s5 + $0x134] sm:$0xff]
    %v1129 = vld [vmem:[%s5 + $0x13c] sm:$0xff]
    %v1130 = vld [vmem:[%s5 + $0x144] sm:$0xff]
    %v1131 = vld [vmem:[%s5 + $0x14c] sm:$0xf]
    %v1132 = vld [vmem:[%s5 + $0x150] sm:$0xff]
    %v1133 = vld [vmem:[%s5 + $0x158] sm:$0xff]
    %v1134 = vld [vmem:[%s5 + $0x160] sm:$0xff]
    %v1135 = vld [vmem:[%s5 + $0x168] sm:$0xf]
    %v1136 = vld [vmem:[%s5 + $0x16c] sm:$0xff]
    %v1137 = vld [vmem:[%s5 + $0x174] sm:$0xff]
    %v1138 = vld [vmem:[%s5 + $0x17c] sm:$0xff]
    %v1139 = vld [vmem:[%s5 + $0x184] sm:$0xf]
    %v1140 = vld [vmem:[%s5 + $0x188] sm:$0xff]
    %v1141 = vld [vmem:[%s5 + $0x190] sm:$0xff]
    %v1142 = vld [vmem:[%s5 + $0x198] sm:$0xff]
    %v1143 = vld [vmem:[%s5 + $0x1a0] sm:$0xf]
    %v1144 = vld [vmem:[%s5 + $0x1a4] sm:$0xff]
    %v1145 = vld [vmem:[%s5 + $0x1ac] sm:$0xff]
    %v1146 = vld [vmem:[%s5 + $0x1b4] sm:$0xff]
    %v1147 = vld [vmem:[%s5 + $0x1bc] sm:$0xf]
    %v1148 = vld [vmem:[%s5 + $0x1c0] sm:$0xff]
    %v1149 = vld [vmem:[%s5 + $0x1c8] sm:$0xff]
    %v1150 = vld [vmem:[%s5 + $0x1d0] sm:$0xff]
    %v1151 = vld [vmem:[%s5 + $0x1d8] sm:$0xf]
    %v1152 = vld [vmem:[%s5 + $0x1dc] sm:$0xff]
    %v1153 = vld [vmem:[%s5 + $0x1e4] sm:$0xff]
    %v1154 = vld [vmem:[%s5 + $0x1ec] sm:$0xff]
    %v1155 = vld [vmem:[%s5 + $0x1f4] sm:$0xf]
    %v1156 = vld [vmem:[%s5 + $0x1f8] sm:$0xff]
    %v1157 = vld [vmem:[%s5 + $0x200] sm:$0xff]
    %v1158 = vld [vmem:[%s5 + $0x208] sm:$0xff]
    %v1159 = vld [vmem:[%s5 + $0x210] sm:$0xf]
    %v1160 = vld [vmem:[%s5 + $0x214] sm:$0xff]
    %v1161 = vld [vmem:[%s5 + $0x21c] sm:$0xff]
    %v1162 = vld [vmem:[%s5 + $0x224] sm:$0xff]
    %v1163 = vld [vmem:[%s5 + $0x22c] sm:$0xf]
    %v1164 = vld [vmem:[%s5 + $0x230] sm:$0xff]
    %v1165 = vld [vmem:[%s5 + $0x238] sm:$0xff]
    %v1166 = vld [vmem:[%s5 + $0x240] sm:$0xff]
    %v1167 = vld [vmem:[%s5 + $0x248] sm:$0xf]
    %v1168 = vld [vmem:[%s5 + $0x24c] sm:$0xff]
    %v1169 = vld [vmem:[%s5 + $0x254] sm:$0xff]
    %v1170 = vld [vmem:[%s5 + $0x25c] sm:$0xff]
    %v1171 = vld [vmem:[%s5 + $0x264] sm:$0xf]
    %v1172 = vld [vmem:[%s5 + $0x268] sm:$0xff]
    %v1173 = vld [vmem:[%s5 + $0x270] sm:$0xff]
    %v1174 = vld [vmem:[%s5 + $0x278] sm:$0xff]
    %v1175 = vld [vmem:[%s5 + $0x280] sm:$0xf]
    %v1176 = vld [vmem:[%s5 + $0x284] sm:$0xff]
    %v1177 = vld [vmem:[%s5 + $0x28c] sm:$0xff]
    %v1178 = vld [vmem:[%s5 + $0x294] sm:$0xff]
    %v1179 = vld [vmem:[%s5 + $0x29c] sm:$0xf]
    %v1180 = vld [vmem:[%s5 + $0x2a0] sm:$0xff]
    %v1181 = vld [vmem:[%s5 + $0x2a8] sm:$0xff]
    %v1182 = vld [vmem:[%s5 + $0x2b0] sm:$0xff]
    %v1183 = vld [vmem:[%s5 + $0x2b8] sm:$0xf]
    %v1184 = vld [vmem:[%s5 + $0x2bc] sm:$0xff]
    %v1185 = vld [vmem:[%s5 + $0x2c4] sm:$0xff]
    %v1186 = vld [vmem:[%s5 + $0x2cc] sm:$0xff]
    %v1187 = vld [vmem:[%s5 + $0x2d4] sm:$0xf]
    %v1188 = vld [vmem:[%s5 + $0x2d8] sm:$0xff]
    %v1189 = vld [vmem:[%s5 + $0x2e0] sm:$0xff]
    %v1190 = vld [vmem:[%s5 + $0x2e8] sm:$0xff]
    %v1191 = vld [vmem:[%s5 + $0x2f0] sm:$0xf]
    %v1192 = vld [vmem:[%s5 + $0x2f4] sm:$0xff]
    %v1193 = vld [vmem:[%s5 + $0x2fc] sm:$0xff]
    %v1194 = vld [vmem:[%s5 + $0x304] sm:$0xff]
    %v1195 = vld [vmem:[%s5 + $0x30c] sm:$0xf]
    %v1196 = vld [vmem:[%s5 + $0x310] sm:$0xff]
    %v1197 = vld [vmem:[%s5 + $0x318] sm:$0xff]
    %v1198 = vld [vmem:[%s5 + $0x320] sm:$0xff]
    %v1199 = vld [vmem:[%s5 + $0x328] sm:$0xf]
    %v1200 = vld [vmem:[%s5 + $0x32c] sm:$0xff]
    %v1201 = vld [vmem:[%s5 + $0x334] sm:$0xff]
    %v1202 = vld [vmem:[%s5 + $0x33c] sm:$0xff]
    %v1203 = vld [vmem:[%s5 + $0x344] sm:$0xf]
    %v1204 = vld [vmem:[%s5 + $0x348] sm:$0xff]
    %v1205 = vld [vmem:[%s5 + $0x350] sm:$0xff]
    %v1206 = vld [vmem:[%s5 + $0x358] sm:$0xff]
    %v1207 = vld [vmem:[%s5 + $0x360] sm:$0xf]
    %v1208 = vld [vmem:[%s5 + $0x364] sm:$0xff]
    %v1209 = vld [vmem:[%s5 + $0x36c] sm:$0xff]
    %v1210 = vld [vmem:[%s5 + $0x374] sm:$0xff]
    %v1211 = vld [vmem:[%s5 + $0x37c] sm:$0xf]
    %v1212 = vld [vmem:[%s6] sm:$0x7f]
    %v1214 = vlaneseq
    %v1215 = vshrl.u32 %v1214, 7
    %v1216 = vsub.s32 0, %v1215
    %v1217 = vrot.slane %v1212, %v1216
    %v1218 = vlaneseq
    %v1219 = vshrl.u32 %v1218, 7
    %v1220 = vsub.s32 1, %v1219
    %v1221 = vrot.slane %v1212, %v1220
    %v1222 = vlaneseq
    %v1223 = vshrl.u32 %v1222, 7
    %v1224 = vsub.s32 2, %v1223
    %v1225 = vrot.slane %v1212, %v1224
    %v1226 = vlaneseq
    %v1227 = vshrl.u32 %v1226, 7
    %v1228 = vsub.s32 3, %v1227
    %v1229 = vrot.slane %v1212, %v1228
    %v1230 = vlaneseq
    %v1231 = vshrl.u32 %v1230, 7
    %v1232 = vsub.s32 4, %v1231
    %v1233 = vrot.slane %v1212, %v1232
    %v1234 = vlaneseq
    %v1235 = vshrl.u32 %v1234, 7
    %v1236 = vsub.s32 5, %v1235
    %v1237 = vrot.slane %v1212, %v1236
    %v1238 = vlaneseq
    %v1239 = vshrl.u32 %v1238, 7
    %v1240 = vsub.s32 6, %v1239
    %v1241 = vrot.slane %v1212, %v1240
    %v1377 = vunpack.c.l.b16 %v1084
    %v1378 = vunpack.c.h.b16 %v1084
    %v1379 = vunpack.c.l.b16 %v1085
    %v1380 = vunpack.c.h.b16 %v1085
    %v1381 = vunpack.c.l.b16 %v1086
    %v1382 = vunpack.c.h.b16 %v1086
    %v1383 = vunpack.c.l.b16 %v1087
    %v1384 = vunpack.c.l.b16 %v1088
    %v1385 = vunpack.c.h.b16 %v1088
    %v1386 = vunpack.c.l.b16 %v1089
    %v1387 = vunpack.c.h.b16 %v1089
    %v1388 = vunpack.c.l.b16 %v1090
    %v1389 = vunpack.c.h.b16 %v1090
    %v1390 = vunpack.c.l.b16 %v1091
    %v1391 = vunpack.c.l.b16 %v1092
    %v1392 = vunpack.c.h.b16 %v1092
    %v1393 = vunpack.c.l.b16 %v1093
    %v1394 = vunpack.c.h.b16 %v1093
    %v1395 = vunpack.c.l.b16 %v1094
    %v1396 = vunpack.c.h.b16 %v1094
    %v1397 = vunpack.c.l.b16 %v1095
    %v1398 = vunpack.c.l.b16 %v1096
    %v1399 = vunpack.c.h.b16 %v1096
    %v1400 = vunpack.c.l.b16 %v1097
    %v1401 = vunpack.c.h.b16 %v1097
    %v1402 = vunpack.c.l.b16 %v1098
    %v1403 = vunpack.c.h.b16 %v1098
    %v1404 = vunpack.c.l.b16 %v1099
    %v1405 = vunpack.c.l.b16 %v1100
    %v1406 = vunpack.c.h.b16 %v1100
    %v1407 = vunpack.c.l.b16 %v1101
    %v1408 = vunpack.c.h.b16 %v1101
    %v1409 = vunpack.c.l.b16 %v1102
    %v1410 = vunpack.c.h.b16 %v1102
    %v1411 = vunpack.c.l.b16 %v1103
    %v1412 = vunpack.c.l.b16 %v1104
    %v1413 = vunpack.c.h.b16 %v1104
    %v1414 = vunpack.c.l.b16 %v1105
    %v1415 = vunpack.c.h.b16 %v1105
    %v1416 = vunpack.c.l.b16 %v1106
    %v1417 = vunpack.c.h.b16 %v1106
    %v1418 = vunpack.c.l.b16 %v1107
    %v1419 = vunpack.c.l.b16 %v1108
    %v1420 = vunpack.c.h.b16 %v1108
    %v1421 = vunpack.c.l.b16 %v1109
    %v1422 = vunpack.c.h.b16 %v1109
    %v1423 = vunpack.c.l.b16 %v1110
    %v1424 = vunpack.c.h.b16 %v1110
    %v1425 = vunpack.c.l.b16 %v1111
    %v1426 = vunpack.c.l.b16 %v1112
    %v1427 = vunpack.c.h.b16 %v1112
    %v1428 = vunpack.c.l.b16 %v1113
    %v1429 = vunpack.c.h.b16 %v1113
    %v1430 = vunpack.c.l.b16 %v1114
    %v1431 = vunpack.c.h.b16 %v1114
    %v1432 = vunpack.c.l.b16 %v1115
    %v1433 = vunpack.c.l.b16 %v1116
    %v1434 = vunpack.c.h.b16 %v1116
    %v1435 = vunpack.c.l.b16 %v1117
    %v1436 = vunpack.c.h.b16 %v1117
    %v1437 = vunpack.c.l.b16 %v1118
    %v1438 = vunpack.c.h.b16 %v1118
    %v1439 = vunpack.c.l.b16 %v1119
    %v1440 = vunpack.c.l.b16 %v1120
    %v1441 = vunpack.c.h.b16 %v1120
    %v1442 = vunpack.c.l.b16 %v1121
    %v1443 = vunpack.c.h.b16 %v1121
    %v1444 = vunpack.c.l.b16 %v1122
    %v1445 = vunpack.c.h.b16 %v1122
    %v1446 = vunpack.c.l.b16 %v1123
    %v1447 = vunpack.c.l.b16 %v1124
    %v1448 = vunpack.c.h.b16 %v1124
    %v1449 = vunpack.c.l.b16 %v1125
    %v1450 = vunpack.c.h.b16 %v1125
    %v1451 = vunpack.c.l.b16 %v1126
    %v1452 = vunpack.c.h.b16 %v1126
    %v1453 = vunpack.c.l.b16 %v1127
    %v1454 = vunpack.c.l.b16 %v1128
    %v1455 = vunpack.c.h.b16 %v1128
    %v1456 = vunpack.c.l.b16 %v1129
    %v1457 = vunpack.c.h.b16 %v1129
    %v1458 = vunpack.c.l.b16 %v1130
    %v1459 = vunpack.c.h.b16 %v1130
    %v1460 = vunpack.c.l.b16 %v1131
    %v1461 = vunpack.c.l.b16 %v1132
    %v1462 = vunpack.c.h.b16 %v1132
    %v1463 = vunpack.c.l.b16 %v1133
    %v1464 = vunpack.c.h.b16 %v1133
    %v1465 = vunpack.c.l.b16 %v1134
    %v1466 = vunpack.c.h.b16 %v1134
    %v1467 = vunpack.c.l.b16 %v1135
    %v1468 = vunpack.c.l.b16 %v1136
    %v1469 = vunpack.c.h.b16 %v1136
    %v1470 = vunpack.c.l.b16 %v1137
    %v1471 = vunpack.c.h.b16 %v1137
    %v1472 = vunpack.c.l.b16 %v1138
    %v1473 = vunpack.c.h.b16 %v1138
    %v1474 = vunpack.c.l.b16 %v1139
    %v1475 = vunpack.c.l.b16 %v1140
    %v1476 = vunpack.c.h.b16 %v1140
    %v1477 = vunpack.c.l.b16 %v1141
    %v1478 = vunpack.c.h.b16 %v1141
    %v1479 = vunpack.c.l.b16 %v1142
    %v1480 = vunpack.c.h.b16 %v1142
    %v1481 = vunpack.c.l.b16 %v1143
    %v1482 = vunpack.c.l.b16 %v1144
    %v1483 = vunpack.c.h.b16 %v1144
    %v1484 = vunpack.c.l.b16 %v1145
    %v1485 = vunpack.c.h.b16 %v1145
    %v1486 = vunpack.c.l.b16 %v1146
    %v1487 = vunpack.c.h.b16 %v1146
    %v1488 = vunpack.c.l.b16 %v1147
    %v1489 = vunpack.c.l.b16 %v1148
    %v1490 = vunpack.c.h.b16 %v1148
    %v1491 = vunpack.c.l.b16 %v1149
    %v1492 = vunpack.c.h.b16 %v1149
    %v1493 = vunpack.c.l.b16 %v1150
    %v1494 = vunpack.c.h.b16 %v1150
    %v1495 = vunpack.c.l.b16 %v1151
    %v1496 = vunpack.c.l.b16 %v1152
    %v1497 = vunpack.c.h.b16 %v1152
    %v1498 = vunpack.c.l.b16 %v1153
    %v1499 = vunpack.c.h.b16 %v1153
    %v1500 = vunpack.c.l.b16 %v1154
    %v1501 = vunpack.c.h.b16 %v1154
    %v1502 = vunpack.c.l.b16 %v1155
    %v1503 = vunpack.c.l.b16 %v1156
    %v1504 = vunpack.c.h.b16 %v1156
    %v1505 = vunpack.c.l.b16 %v1157
    %v1506 = vunpack.c.h.b16 %v1157
    %v1507 = vunpack.c.l.b16 %v1158
    %v1508 = vunpack.c.h.b16 %v1158
    %v1509 = vunpack.c.l.b16 %v1159
    %v1510 = vunpack.c.l.b16 %v1160
    %v1511 = vunpack.c.h.b16 %v1160
    %v1512 = vunpack.c.l.b16 %v1161
    %v1513 = vunpack.c.h.b16 %v1161
    %v1514 = vunpack.c.l.b16 %v1162
    %v1515 = vunpack.c.h.b16 %v1162
    %v1516 = vunpack.c.l.b16 %v1163
    %v1517 = vunpack.c.l.b16 %v1164
    %v1518 = vunpack.c.h.b16 %v1164
    %v1519 = vunpack.c.l.b16 %v1165
    %v1520 = vunpack.c.h.b16 %v1165
    %v1521 = vunpack.c.l.b16 %v1166
    %v1522 = vunpack.c.h.b16 %v1166
    %v1523 = vunpack.c.l.b16 %v1167
    %v1524 = vunpack.c.l.b16 %v1168
    %v1525 = vunpack.c.h.b16 %v1168
    %v1526 = vunpack.c.l.b16 %v1169
    %v1527 = vunpack.c.h.b16 %v1169
    %v1528 = vunpack.c.l.b16 %v1170
    %v1529 = vunpack.c.h.b16 %v1170
    %v1530 = vunpack.c.l.b16 %v1171
    %v1531 = vunpack.c.l.b16 %v1172
    %v1532 = vunpack.c.h.b16 %v1172
    %v1533 = vunpack.c.l.b16 %v1173
    %v1534 = vunpack.c.h.b16 %v1173
    %v1535 = vunpack.c.l.b16 %v1174
    %v1536 = vunpack.c.h.b16 %v1174
    %v1537 = vunpack.c.l.b16 %v1175
    %v1538 = vunpack.c.l.b16 %v1176
    %v1539 = vunpack.c.h.b16 %v1176
    %v1540 = vunpack.c.l.b16 %v1177
    %v1541 = vunpack.c.h.b16 %v1177
    %v1542 = vunpack.c.l.b16 %v1178
    %v1543 = vunpack.c.h.b16 %v1178
    %v1544 = vunpack.c.l.b16 %v1179
    %v1545 = vunpack.c.l.b16 %v1180
    %v1546 = vunpack.c.h.b16 %v1180
    %v1547 = vunpack.c.l.b16 %v1181
    %v1548 = vunpack.c.h.b16 %v1181
    %v1549 = vunpack.c.l.b16 %v1182
    %v1550 = vunpack.c.h.b16 %v1182
    %v1551 = vunpack.c.l.b16 %v1183
    %v1552 = vunpack.c.l.b16 %v1184
    %v1553 = vunpack.c.h.b16 %v1184
    %v1554 = vunpack.c.l.b16 %v1185
    %v1555 = vunpack.c.h.b16 %v1185
    %v1556 = vunpack.c.l.b16 %v1186
    %v1557 = vunpack.c.h.b16 %v1186
    %v1558 = vunpack.c.l.b16 %v1187
    %v1559 = vunpack.c.l.b16 %v1188
    %v1560 = vunpack.c.h.b16 %v1188
    %v1561 = vunpack.c.l.b16 %v1189
    %v1562 = vunpack.c.h.b16 %v1189
    %v1563 = vunpack.c.l.b16 %v1190
    %v1564 = vunpack.c.h.b16 %v1190
    %v1565 = vunpack.c.l.b16 %v1191
    %v1566 = vunpack.c.l.b16 %v1192
    %v1567 = vunpack.c.h.b16 %v1192
    %v1568 = vunpack.c.l.b16 %v1193
    %v1569 = vunpack.c.h.b16 %v1193
    %v1570 = vunpack.c.l.b16 %v1194
    %v1571 = vunpack.c.h.b16 %v1194
    %v1572 = vunpack.c.l.b16 %v1195
    %v1573 = vunpack.c.l.b16 %v1196
    %v1574 = vunpack.c.h.b16 %v1196
    %v1575 = vunpack.c.l.b16 %v1197
    %v1576 = vunpack.c.h.b16 %v1197
    %v1577 = vunpack.c.l.b16 %v1198
    %v1578 = vunpack.c.h.b16 %v1198
    %v1579 = vunpack.c.l.b16 %v1199
    %v1580 = vunpack.c.l.b16 %v1200
    %v1581 = vunpack.c.h.b16 %v1200
    %v1582 = vunpack.c.l.b16 %v1201
    %v1583 = vunpack.c.h.b16 %v1201
    %v1584 = vunpack.c.l.b16 %v1202
    %v1585 = vunpack.c.h.b16 %v1202
    %v1586 = vunpack.c.l.b16 %v1203
    %v1587 = vunpack.c.l.b16 %v1204
    %v1588 = vunpack.c.h.b16 %v1204
    %v1589 = vunpack.c.l.b16 %v1205
    %v1590 = vunpack.c.h.b16 %v1205
    %v1591 = vunpack.c.l.b16 %v1206
    %v1592 = vunpack.c.h.b16 %v1206
    %v1593 = vunpack.c.l.b16 %v1207
    %v1594 = vunpack.c.l.b16 %v1208
    %v1595 = vunpack.c.h.b16 %v1208
    %v1596 = vunpack.c.l.b16 %v1209
    %v1597 = vunpack.c.h.b16 %v1209
    %v1598 = vunpack.c.l.b16 %v1210
    %v1599 = vunpack.c.h.b16 %v1210
    %v1600 = vunpack.c.l.b16 %v1211
    %v1601 = vpack.c.b16 %v1384, %v1377
    %v1602 = vpack.c.b16 %v1385, %v1378
    %v1603 = vpack.c.b16 %v1386, %v1379
    %v1604 = vpack.c.b16 %v1387, %v1380
    %v1605 = vpack.c.b16 %v1388, %v1381
    %v1606 = vpack.c.b16 %v1389, %v1382
    %v1607 = vpack.c.b16 %v1390, %v1383
    %v1608 = vpack.c.b16 %v1398, %v1391
    %v1609 = vpack.c.b16 %v1399, %v1392
    %v1610 = vpack.c.b16 %v1400, %v1393
    %v1611 = vpack.c.b16 %v1401, %v1394
    %v1612 = vpack.c.b16 %v1402, %v1395
    %v1613 = vpack.c.b16 %v1403, %v1396
    %v1614 = vpack.c.b16 %v1404, %v1397
    %v1615 = vpack.c.b16 %v1412, %v1405
    %v1616 = vpack.c.b16 %v1413, %v1406
    %v1617 = vpack.c.b16 %v1414, %v1407
    %v1618 = vpack.c.b16 %v1415, %v1408
    %v1619 = vpack.c.b16 %v1416, %v1409
    %v1620 = vpack.c.b16 %v1417, %v1410
    %v1621 = vpack.c.b16 %v1418, %v1411
    %v1622 = vpack.c.b16 %v1426, %v1419
    %v1623 = vpack.c.b16 %v1427, %v1420
    %v1624 = vpack.c.b16 %v1428, %v1421
    %v1625 = vpack.c.b16 %v1429, %v1422
    %v1626 = vpack.c.b16 %v1430, %v1423
    %v1627 = vpack.c.b16 %v1431, %v1424
    %v1628 = vpack.c.b16 %v1432, %v1425
    %v1629 = vpack.c.b16 %v1440, %v1433
    %v1630 = vpack.c.b16 %v1441, %v1434
    %v1631 = vpack.c.b16 %v1442, %v1435
    %v1632 = vpack.c.b16 %v1443, %v1436
    %v1633 = vpack.c.b16 %v1444, %v1437
    %v1634 = vpack.c.b16 %v1445, %v1438
    %v1635 = vpack.c.b16 %v1446, %v1439
    %v1636 = vpack.c.b16 %v1454, %v1447
    %v1637 = vpack.c.b16 %v1455, %v1448
    %v1638 = vpack.c.b16 %v1456, %v1449
    %v1639 = vpack.c.b16 %v1457, %v1450
    %v1640 = vpack.c.b16 %v1458, %v1451
    %v1641 = vpack.c.b16 %v1459, %v1452
    %v1642 = vpack.c.b16 %v1460, %v1453
    %v1643 = vpack.c.b16 %v1468, %v1461
    %v1644 = vpack.c.b16 %v1469, %v1462
    %v1645 = vpack.c.b16 %v1470, %v1463
    %v1646 = vpack.c.b16 %v1471, %v1464
    %v1647 = vpack.c.b16 %v1472, %v1465
    %v1648 = vpack.c.b16 %v1473, %v1466
    %v1649 = vpack.c.b16 %v1474, %v1467
    %v1650 = vpack.c.b16 %v1482, %v1475
    %v1651 = vpack.c.b16 %v1483, %v1476
    %v1652 = vpack.c.b16 %v1484, %v1477
    %v1653 = vpack.c.b16 %v1485, %v1478
    %v1654 = vpack.c.b16 %v1486, %v1479
    %v1655 = vpack.c.b16 %v1487, %v1480
    %v1656 = vpack.c.b16 %v1488, %v1481
    %v1657 = vpack.c.b16 %v1496, %v1489
    %v1658 = vpack.c.b16 %v1497, %v1490
    %v1659 = vpack.c.b16 %v1498, %v1491
    %v1660 = vpack.c.b16 %v1499, %v1492
    %v1661 = vpack.c.b16 %v1500, %v1493
    %v1662 = vpack.c.b16 %v1501, %v1494
    %v1663 = vpack.c.b16 %v1502, %v1495
    %v1664 = vpack.c.b16 %v1510, %v1503
    %v1665 = vpack.c.b16 %v1511, %v1504
    %v1666 = vpack.c.b16 %v1512, %v1505
    %v1667 = vpack.c.b16 %v1513, %v1506
    %v1668 = vpack.c.b16 %v1514, %v1507
    %v1669 = vpack.c.b16 %v1515, %v1508
    %v1670 = vpack.c.b16 %v1516, %v1509
    %v1671 = vpack.c.b16 %v1524, %v1517
    %v1672 = vpack.c.b16 %v1525, %v1518
    %v1673 = vpack.c.b16 %v1526, %v1519
    %v1674 = vpack.c.b16 %v1527, %v1520
    %v1675 = vpack.c.b16 %v1528, %v1521
    %v1676 = vpack.c.b16 %v1529, %v1522
    %v1677 = vpack.c.b16 %v1530, %v1523
    %v1678 = vpack.c.b16 %v1538, %v1531
    %v1679 = vpack.c.b16 %v1539, %v1532
    %v1680 = vpack.c.b16 %v1540, %v1533
    %v1681 = vpack.c.b16 %v1541, %v1534
    %v1682 = vpack.c.b16 %v1542, %v1535
    %v1683 = vpack.c.b16 %v1543, %v1536
    %v1684 = vpack.c.b16 %v1544, %v1537
    %v1685 = vpack.c.b16 %v1552, %v1545
    %v1686 = vpack.c.b16 %v1553, %v1546
    %v1687 = vpack.c.b16 %v1554, %v1547
    %v1688 = vpack.c.b16 %v1555, %v1548
    %v1689 = vpack.c.b16 %v1556, %v1549
    %v1690 = vpack.c.b16 %v1557, %v1550
    %v1691 = vpack.c.b16 %v1558, %v1551
    %v1692 = vpack.c.b16 %v1566, %v1559
    %v1693 = vpack.c.b16 %v1567, %v1560
    %v1694 = vpack.c.b16 %v1568, %v1561
    %v1695 = vpack.c.b16 %v1569, %v1562
    %v1696 = vpack.c.b16 %v1570, %v1563
    %v1697 = vpack.c.b16 %v1571, %v1564
    %v1698 = vpack.c.b16 %v1572, %v1565
    %v1699 = vpack.c.b16 %v1580, %v1573
    %v1700 = vpack.c.b16 %v1581, %v1574
    %v1701 = vpack.c.b16 %v1582, %v1575
    %v1702 = vpack.c.b16 %v1583, %v1576
    %v1703 = vpack.c.b16 %v1584, %v1577
    %v1704 = vpack.c.b16 %v1585, %v1578
    %v1705 = vpack.c.b16 %v1586, %v1579
    %v1706 = vpack.c.b16 %v1594, %v1587
    %v1707 = vpack.c.b16 %v1595, %v1588
    %v1708 = vpack.c.b16 %v1596, %v1589
    %v1709 = vpack.c.b16 %v1597, %v1590
    %v1710 = vpack.c.b16 %v1598, %v1591
    %v1711 = vpack.c.b16 %v1599, %v1592
    %v1712 = vpack.c.b16 %v1600, %v1593
    %1825 = vmatprep.subr.bf16.mxu0 %v1602
    %1826 = vmatpush1.bf16.msra.mxu0 %v1601
    %1827 = vmatprep.subr.bf16.mxu0 %v1609
    %1828 = vmatpush1.bf16.msra.mxu0 %v1608
    %1829 = vmatprep.subr.bf16.mxu0 %v1616
    %1830 = vmatpush1.bf16.msra.mxu0 %v1615
    %1831 = vmatprep.subr.bf16.mxu0 %v1623
    %1832 = vmatpush1.bf16.msra.mxu0 %v1622
    %1833 = vmatprep.subr.bf16.mxu0 %v1630
    %1834 = vmatpush1.bf16.msra.mxu0 %v1629
    %1835 = vmatprep.subr.bf16.mxu0 %v1637
    %1836 = vmatpush1.bf16.msra.mxu0 %v1636
    %1837 = vmatprep.subr.bf16.mxu0 %v1644
    %1838 = vmatpush1.bf16.msra.mxu0 %v1643
    %1839 = vmatprep.subr.bf16.mxu0 %v1651
    %1840 = vmatpush1.bf16.msra.mxu0 %v1650
    %1841 = vmatprep.subr.bf16.mxu0 %v1658
    %1842 = vmatpush1.bf16.msra.mxu0 %v1657
    %1843 = vmatprep.subr.bf16.mxu0 %v1665
    %1844 = vmatpush1.bf16.msra.mxu0 %v1664
    %1845 = vmatprep.subr.bf16.mxu0 %v1672
    %1846 = vmatpush1.bf16.msra.mxu0 %v1671
    %1847 = vmatprep.subr.bf16.mxu0 %v1679
    %1848 = vmatpush1.bf16.msra.mxu0 %v1678
    %1849 = vmatprep.subr.bf16.mxu0 %v1686
    %1850 = vmatpush1.bf16.msra.mxu0 %v1685
    %1851 = vmatprep.subr.bf16.mxu0 %v1693
    %1852 = vmatpush1.bf16.msra.mxu0 %v1692
    %1853 = vmatprep.subr.bf16.mxu0 %v1700
    %1854 = vmatpush1.bf16.msra.mxu0 %v1699
    %1855 = vmatprep.subr.bf16.mxu0 %v1707
    %1856 = vmatpush1.bf16.msra.mxu0 %v1706
    %1857 = vmatprep.mubr.bf16.mxu0 %v1083
    %1858 = vmatmul.mubr.bf16.gmra.mrb[0].mxu0 %v1082
    %v1859 = vpop.f32.mrb[0].mxu0
    %v1860 = vadd.f32 %v1217, %v1859
    %v1861 = vpop.f32.mrb[0].mxu0
    %v1862 = vadd.f32 %v1221, %v1861
    %v1863 = vpop.f32.mrb[0].mxu0
    %v1864 = vadd.f32 %v1217, %v1863
    %v1865 = vpop.f32.mrb[0].mxu0
    %v1866 = vadd.f32 %v1221, %v1865
    %1867 = vdwg.mxu0
    %1868 = vmatprep.subr.bf16.mxu0 %v1604
    %1869 = vmatpush1.bf16.msra.mxu0 %v1603
    %1870 = vmatprep.subr.bf16.mxu0 %v1611
    %1871 = vmatpush1.bf16.msra.mxu0 %v1610
    %1872 = vmatprep.subr.bf16.mxu0 %v1618
    %1873 = vmatpush1.bf16.msra.mxu0 %v1617
    %1874 = vmatprep.subr.bf16.mxu0 %v1625
    %1875 = vmatpush1.bf16.msra.mxu0 %v1624
    %1876 = vmatprep.subr.bf16.mxu0 %v1632
    %1877 = vmatpush1.bf16.msra.mxu0 %v1631
    %1878 = vmatprep.subr.bf16.mxu0 %v1639
    %1879 = vmatpush1.bf16.msra.mxu0 %v1638
    %1880 = vmatprep.subr.bf16.mxu0 %v1646
    %1881 = vmatpush1.bf16.msra.mxu0 %v1645
    %1882 = vmatprep.subr.bf16.mxu0 %v1653
    %1883 = vmatpush1.bf16.msra.mxu0 %v1652
    %1884 = vmatprep.subr.bf16.mxu0 %v1660
    %1885 = vmatpush1.bf16.msra.mxu0 %v1659
    %1886 = vmatprep.subr.bf16.mxu0 %v1667
    %1887 = vmatpush1.bf16.msra.mxu0 %v1666
    %1888 = vmatprep.subr.bf16.mxu0 %v1674
    %1889 = vmatpush1.bf16.msra.mxu0 %v1673
    %1890 = vmatprep.subr.bf16.mxu0 %v1681
    %1891 = vmatpush1.bf16.msra.mxu0 %v1680
    %1892 = vmatprep.subr.bf16.mxu0 %v1688
    %1893 = vmatpush1.bf16.msra.mxu0 %v1687
    %1894 = vmatprep.subr.bf16.mxu0 %v1695
    %1895 = vmatpush1.bf16.msra.mxu0 %v1694
    %1896 = vmatprep.subr.bf16.mxu0 %v1702
    %1897 = vmatpush1.bf16.msra.mxu0 %v1701
    %1898 = vmatprep.subr.bf16.mxu0 %v1709
    %1899 = vmatpush1.bf16.msra.mxu0 %v1708
    %1900 = vmatprep.mubr.bf16.mxu0 %v1083
    %1901 = vmatmul.mubr.bf16.gmra.mrb[0].mxu0 %v1082
    %v1902 = vpop.f32.mrb[0].mxu0
    %v1903 = vadd.f32 %v1225, %v1902
    %v1904 = vpop.f32.mrb[0].mxu0
    %v1905 = vadd.f32 %v1229, %v1904
    %v1906 = vpop.f32.mrb[0].mxu0
    %v1907 = vadd.f32 %v1225, %v1906
    %v1908 = vpop.f32.mrb[0].mxu0
    %v1909 = vadd.f32 %v1229, %v1908
    %1910 = vdwg.mxu0
    %1911 = vmatprep.subr.bf16.mxu0 %v1606
    %1912 = vmatpush1.bf16.msra.mxu0 %v1605
    %1913 = vmatprep.subr.bf16.mxu0 %v1613
    %1914 = vmatpush1.bf16.msra.mxu0 %v1612
    %1915 = vmatprep.subr.bf16.mxu0 %v1620
    %1916 = vmatpush1.bf16.msra.mxu0 %v1619
    %1917 = vmatprep.subr.bf16.mxu0 %v1627
    %1918 = vmatpush1.bf16.msra.mxu0 %v1626
    %1919 = vmatprep.subr.bf16.mxu0 %v1634
    %1920 = vmatpush1.bf16.msra.mxu0 %v1633
    %1921 = vmatprep.subr.bf16.mxu0 %v1641
    %1922 = vmatpush1.bf16.msra.mxu0 %v1640
    %1923 = vmatprep.subr.bf16.mxu0 %v1648
    %1924 = vmatpush1.bf16.msra.mxu0 %v1647
    %1925 = vmatprep.subr.bf16.mxu0 %v1655
    %1926 = vmatpush1.bf16.msra.mxu0 %v1654
    %1927 = vmatprep.subr.bf16.mxu0 %v1662
    %1928 = vmatpush1.bf16.msra.mxu0 %v1661
    %1929 = vmatprep.subr.bf16.mxu0 %v1669
    %1930 = vmatpush1.bf16.msra.mxu0 %v1668
    %1931 = vmatprep.subr.bf16.mxu0 %v1676
    %1932 = vmatpush1.bf16.msra.mxu0 %v1675
    %1933 = vmatprep.subr.bf16.mxu0 %v1683
    %1934 = vmatpush1.bf16.msra.mxu0 %v1682
    %1935 = vmatprep.subr.bf16.mxu0 %v1690
    %1936 = vmatpush1.bf16.msra.mxu0 %v1689
    %1937 = vmatprep.subr.bf16.mxu0 %v1697
    %1938 = vmatpush1.bf16.msra.mxu0 %v1696
    %1939 = vmatprep.subr.bf16.mxu0 %v1704
    %1940 = vmatpush1.bf16.msra.mxu0 %v1703
    %1941 = vmatprep.subr.bf16.mxu0 %v1711
    %1942 = vmatpush1.bf16.msra.mxu0 %v1710
    %1943 = vmatprep.mubr.bf16.mxu0 %v1083
    %1944 = vmatmul.mubr.bf16.gmra.mrb[0].mxu0 %v1082
    %v1945 = vpop.f32.mrb[0].mxu0
    %v1946 = vadd.f32 %v1233, %v1945
    %v1947 = vpop.f32.mrb[0].mxu0
    %v1948 = vadd.f32 %v1237, %v1947
    %v1949 = vpop.f32.mrb[0].mxu0
    %v1950 = vadd.f32 %v1233, %v1949
    %v1951 = vpop.f32.mrb[0].mxu0
    %v1952 = vadd.f32 %v1237, %v1951
    %1953 = vdwg.mxu0
    %1954 = vmatprep.subr.bf16.mxu0 0
    %1955 = vmatpush1.bf16.msra.mxu0 %v1607
    %1956 = vmatprep.subr.bf16.mxu0 0
    %1957 = vmatpush1.bf16.msra.mxu0 %v1614
    %1958 = vmatprep.subr.bf16.mxu0 0
    %1959 = vmatpush1.bf16.msra.mxu0 %v1621
    %1960 = vmatprep.subr.bf16.mxu0 0
    %1961 = vmatpush1.bf16.msra.mxu0 %v1628
    %1962 = vmatprep.subr.bf16.mxu0 0
    %1963 = vmatpush1.bf16.msra.mxu0 %v1635
    %1964 = vmatprep.subr.bf16.mxu0 0
    %1965 = vmatpush1.bf16.msra.mxu0 %v1642
    %1966 = vmatprep.subr.bf16.mxu0 0
    %1967 = vmatpush1.bf16.msra.mxu0 %v1649
    %1968 = vmatprep.subr.bf16.mxu0 0
    %1969 = vmatpush1.bf16.msra.mxu0 %v1656
    %1970 = vmatprep.subr.bf16.mxu0 0
    %1971 = vmatpush1.bf16.msra.mxu0 %v1663
    %1972 = vmatprep.subr.bf16.mxu0 0
    %1973 = vmatpush1.bf16.msra.mxu0 %v1670
    %1974 = vmatprep.subr.bf16.mxu0 0
    %1975 = vmatpush1.bf16.msra.mxu0 %v1677
    %1976 = vmatprep.subr.bf16.mxu0 0
    %1977 = vmatpush1.bf16.msra.mxu0 %v1684
    %1978 = vmatprep.subr.bf16.mxu0 0
    %1979 = vmatpush1.bf16.msra.mxu0 %v1691
    %1980 = vmatprep.subr.bf16.mxu0 0
    %1981 = vmatpush1.bf16.msra.mxu0 %v1698
    %1982 = vmatprep.subr.bf16.mxu0 0
    %1983 = vmatpush1.bf16.msra.mxu0 %v1705
    %1984 = vmatprep.subr.bf16.mxu0 0
    %1985 = vmatpush1.bf16.msra.mxu0 %v1712
    %1986 = vmatprep.mubr.bf16.mxu0 %v1083
    %1987 = vmatmul.mubr.bf16.gmra.mrb[0].mxu0 %v1082
    %v1988 = vpop.f32.mrb[0].mxu0
    %v1989 = vadd.f32 %v1241, %v1988
    %v1990 = vpop.f32.mrb[0].mxu0
    %v1991 = vpop.f32.mrb[0].mxu0
    %v1992 = vadd.f32 %v1241, %v1991
    %v1993 = vpop.f32.mrb[0].mxu0
    %1994 = vdwg.mxu0
    %v1995 = vtanh.pop %v1860
    %v1996 = vtanh.pop %v1862
    %v1997 = vtanh.pop %v1903
    %v1998 = vtanh.pop %v1905
    %v1999 = vtanh.pop %v1946
    %v2000 = vtanh.pop %v1948
    %v2001 = vtanh.pop %v1989
    %v2002 = vtanh.pop %v1864
    %v2003 = vtanh.pop %v1866
    %v2004 = vtanh.pop %v1907
    %v2005 = vtanh.pop %v1909
    %v2006 = vtanh.pop %v1950
    %v2007 = vtanh.pop %v1952
    %v2008 = vtanh.pop %v1992
    %2009 = vst [vmem:[#allocation2] sm:$0xff] %v1995
    %2010 = vst [vmem:[#allocation2 + $0x8] sm:$0xff] %v1996
    %2011 = vst [vmem:[#allocation2 + $0x10] sm:$0xff] %v1997
    %2012 = vst [vmem:[#allocation2 + $0x18] sm:$0xff] %v1998
    %2013 = vst [vmem:[#allocation2 + $0x20] sm:$0xff] %v1999
    %2014 = vst [vmem:[#allocation2 + $0x28] sm:$0xff] %v2000
    %2015 = vst.msk [vmem:[#allocation2 + $0x30] sm:$0xff] %vm649, %v2001
    %2016 = vst [vmem:[#allocation2 + $0x38] sm:$0xff] %v2002
    %2017 = vst [vmem:[#allocation2 + $0x40] sm:$0xff] %v2003
    %2018 = vst [vmem:[#allocation2 + $0x48] sm:$0xff] %v2004
    %2019 = vst [vmem:[#allocation2 + $0x50] sm:$0xff] %v2005
    %2020 = vst [vmem:[#allocation2 + $0x58] sm:$0xff] %v2006
    %2021 = vst [vmem:[#allocation2 + $0x60] sm:$0xff] %v2007
    %2022 = vst.msk [vmem:[#allocation2 + $0x68] sm:$0xff] %vm649, %v2008
    // Predicated region
    $region30: #{generator_forward.1} parent=1 // pred_check
      _
    $region31: #{generator_forward.1} parent=1 // pred_check_branch
      %2024 = sbr.rel (0) target = $region33
    $region32: #{generator_forward.1} parent=1 // pred_region
      %s2026 = ssub.s32 1792, 1792
      %2027 = vsyncadd [#allocation3], %s2026
      %s2028 = sshll.u32 [#allocation2], 4
      %s2029 = int_to_ptr.vmem [resolvable:$true] %s2028
      %2034 = dma.vmem_to_hbm [thread:$0]  %s2029, 1792, %s7, [#allocation3], 896, 896, 56
    $region33: #{generator_forward.1} parent=1 // pred_fallthru
      _
    // Predicated region
    $region34: #{generator_forward.1} parent=1 // pred_check
      _
    $region35: #{generator_forward.1} parent=1 // pred_check_branch
      %2036 = sbr.rel (0) target = $region37
    $region36: #{generator_forward.1} parent=1 // pred_region
      %2037 = dma.done [#allocation3], 1792
    $region37: #{generator_forward.1} parent=1 // pred_fallthru
      _
    %2038 = vsyncpa [#allocation3], 1

</llo_original>
